<compile_context>
chip_gen: v7x
topology: tpu7x:2x2x1
jax: 0.10.0
libtpu: 0.0.40
codegen_flags: <defaults>
</compile_context>

<pallas_src>
import jax
import jax.numpy as jnp
from jax.experimental import pallas as pl
from jax.experimental.pallas import tpu as pltpu


def patch_recovery3d(x, weight, bias, img_size, patch_size, *,
                     payload_target_bytes=4 * 1024 * 1024):
    """Equivalent of PatchRecovery3D.forward.

    x:      (B, C_in, Pl_in, Lat_in, Lon_in)   -- NCDHW like PyTorch
    weight: (C_in, C_out, kp, kl, kw)          -- ConvTranspose3d weight layout
    bias:   (C_out,)
    """
    B, Cin, Pl_in, Lat_in, Lon_in = x.shape
    Cin_w, Cout, kp, kl, kw = weight.shape
    assert Cin == Cin_w and (kp, kl, kw) == tuple(patch_size)

    # ---- crop arithmetic (same as the PyTorch module) ---------------------
    def _split(pad):
        f = pad // 2
        return f, pad - f

    pf, pb = _split(Pl_in * kp - img_size[0])      # Pl  front/back
    pt, pbm = _split(Lat_in * kl - img_size[1])    # Lat top/bottom
    plf, prt = _split(Lon_in * kw - img_size[2])   # Lon left/right

    # Drop tokens whose patches are *entirely* cropped away (no-op for the
    # usual case where margins are smaller than one patch).
    tf, tb = pf // kp, pb // kp
    tt, tbt = pt // kl, pbm // kl
    tl, tr = plf // kw, prt // kw
    if tf or tb or tt or tbt or tl or tr:
        x = x[:, :, tf:Pl_in - tb, tt:Lat_in - tbt, tl:Lon_in - tr]
    Pl_t, Lat_t, Lon_t = x.shape[2], x.shape[3], x.shape[4]
    pf, pb = pf - tf * kp, pb - tb * kp
    pt, pbm = pt - tt * kl, pbm - tbt * kl
    plf, prt = plf - tl * kw, prt - tr * kw

    K = Cin
    Mp = Cout * kp * kl                     # output rows per kw position
    MPAD = ((Mp + 127) // 128) * 128        # lane-pad -> in-kernel retile is free
    NPAD = kw * MPAD
    N = Cout * kp * kl * kw
    LW = Lon_t * kw
    dt = x.dtype
    itemsize = jnp.dtype(dt).itemsize

    # ---- resident operands (tiny, built once in plain JAX) ----------------
    # weight columns ordered (kw-major, (Cout,kp,kl)-minor), zero padded to MPAD
    w2 = jnp.transpose(weight.reshape(K, Mp, kw), (0, 2, 1))       # (K, kw, Mp)
    w2 = jnp.pad(w2, ((0, 0), (0, 0), (0, MPAD - Mp)))
    w2 = w2.reshape(K, NPAD).astype(dt)
    bb = jnp.broadcast_to(bias[:, None], (Cout, kp * kl)).reshape(Mp)
    bb = jnp.pad(bb, (0, MPAD - Mp))
    b2 = jnp.broadcast_to(bb[None, :], (kw, MPAD)).reshape(1, NPAD).astype(dt)

    # ---- group TLat latitude rows per grid step to hit the DMA target -----
    row_bytes = (K + N) * Lon_t * itemsize
    if Lat_t * row_bytes <= payload_target_bytes or Lat_t <= 8:
        TLat = Lat_t
    else:
        TLat = max(8, (payload_target_bytes // row_bytes) // 8 * 8)
        TLat = min(TLat, (Lat_t // 8) * 8)
    n_lat = pl.cdiv(Lat_t, TLat)
    grid = (B, Pl_t, n_lat)

    # ---- kernel ------------------------------------------------------------
    def kernel(x_ref, w_ref, b_ref, o_ref):
        # x_ref: (K, TLat, Lon_t)   w_ref: (K, NPAD)   b_ref: (1, NPAD)
        # o_ref: (Cout, kp, TLat, kl, Lon_t*kw)
        w = w_ref[...]
        b = b_ref[...]
        for t in range(TLat):                       # static, small
            x2 = x_ref[:, t, :]                     # (K, Lon_t)
            # (Lon_t, NPAD): tokens on sublanes, (kw, padded-Mp) on lanes
            q = jax.lax.dot_general(
                x2, w, (((0,), (0,)), ((), ())),
                preferred_element_type=jnp.float32)
            q = q + b
            # free retile (128-aligned lane split), then one minor transpose:
            # z[m, l*kw + k] = q[l, k*MPAD + m]
            z = q.reshape(Lon_t * kw, MPAD).T        # (MPAD, Lon_t*kw)
            for c in range(Cout):
                for i in range(kp):
                    r = (c * kp + i) * kl
                    o_ref[c, i, t, :, :] = z[r:r + kl, :].astype(o_ref.dtype)

    cost = pl.CostEstimate(
        flops=2 * B * Pl_t * Lat_t * Lon_t * K * NPAD,
        transcendentals=0,
        bytes_accessed=itemsize * (B * Pl_t * Lat_t * Lon_t * (K + N)
                                   + K * NPAD + NPAD),
    )

    out7 = pl.pallas_call(
        kernel,
        out_shape=jax.ShapeDtypeStruct((B, Cout, Pl_t, kp, Lat_t, kl, LW), dt),
        grid_spec=pl.GridSpec(
            grid=grid,
            in_specs=[
                # x tile: one batch, one Pl row, TLat lat rows, full Lon
                pl.BlockSpec((None, K, None, TLat, Lon_t),
                             lambda b, p, l: (b, 0, p, l, 0)),
                # resident transposed/padded weight
                pl.BlockSpec((K, NPAD), lambda b, p, l: (0, 0)),
                # resident bias (expanded over kernel positions, padded)
                pl.BlockSpec((1, NPAD), lambda b, p, l: (0, 0)),
            ],
            # scattered patch slab: reshapes for free to NCDHW afterwards
            out_specs=pl.BlockSpec((None, Cout, None, kp, TLat, kl, LW),
                                   lambda b, p, l: (b, 0, p, 0, l, 0, 0)),
        ),
        compiler_params=pltpu.CompilerParams(
            dimension_semantics=("parallel", "parallel", "parallel"),
            vmem_limit_bytes=32 * 1024 * 1024,
        ),
        cost_estimate=cost,
    )(x, w2, b2)

    # free reshape to the dense NCDHW pre-crop volume, then residual crop
    out = out7.reshape(B, Cout, Pl_t * kp, Lat_t * kl, LW)
    return out[:, :,
               pf:Pl_t * kp - pb,
               pt:Lat_t * kl - pbm,
               plf:LW - prt]


if __name__ == "__main__":
    # Small, deterministic configuration
    img_size = (2, 15, 15)           # (Pl, Lat, Lon) target after crop
    patch_size = (1, 4, 4)
    in_chans = 32
    out_chans = 4
    B = 2
    Pl_in, Lat_in, Lon_in = 2, 4, 4  # latent grid; pre-crop output = (2, 16, 16)

    key = jax.random.PRNGKey(0)
    kx, kw_, kb = jax.random.split(key, 3)
    x = jax.random.normal(kx, (B, in_chans, Pl_in, Lat_in, Lon_in), dtype=jnp.float32)
    weight = 0.05 * jax.random.normal(kw_, (in_chans, out_chans) + patch_size,
                                      dtype=jnp.float32)
    bias = 0.1 * jax.random.normal(kb, (out_chans,), dtype=jnp.float32)

    out = patch_recovery3d(x, weight, bias, img_size, patch_size)
    out = jax.block_until_ready(out)

    # Independent plain-JAX reference (ConvTranspose3d with stride == kernel,
    # then center crop).
    ref = jnp.einsum("bcplw,coijk->bopiljwk", x, weight)
    ref = ref.reshape(B, out_chans, Pl_in * patch_size[0],
                      Lat_in * patch_size[1], Lon_in * patch_size[2])
    ref = ref + bias[None, :, None, None, None]
    Pl, Lat, Lon = ref.shape[2:]
    rf = (Pl - img_size[0]) // 2
    rt = (Lat - img_size[1]) // 2
    rl = (Lon - img_size[2]) // 2
    ref = ref[:, :,
              rf:rf + img_size[0],
              rt:rt + img_size[1],
              rl:rl + img_size[2]]

    assert out.shape == (B, out_chans) + img_size, out.shape
    assert jnp.allclose(out, ref, atol=1e-4, rtol=1e-4), \
        float(jnp.max(jnp.abs(out - ref)))
    print("KERNEL_OK")
</pallas_src>

<mosaic_0001>
module attributes {stable_mosaic.version = 11 : i64} {
  func.func @kernel(%arg0: i32, %arg1: i32, %arg2: i32, %arg3: memref<1x32x1x4x4xf32, #tpu.memory_space<vmem>>, %arg4: memref<32x512xf32, #tpu.memory_space<vmem>>, %arg5: memref<1x512xf32, #tpu.memory_space<vmem>>, %arg6: memref<1x4x1x1x4x4x16xf32, #tpu.memory_space<vmem>>) attributes {dimension_semantics = [#tpu.dimension_semantics<parallel>, #tpu.dimension_semantics<parallel>, #tpu.dimension_semantics<parallel>], iteration_bounds = array<i64: 2, 2, 1>, scalar_prefetch = 0 : i64, scratch_operands = 0 : i64, tpu.core_type = #tpu.core_type<tc>, window_params = [{transform_indices = @transform_0, window_bounds = array<i64: 1, 32, 1, 4, 4>}, {pipeline_mode = #tpu.pipeline_mode<synchronous>, transform_indices = @transform_1, window_bounds = array<i64: 32, 512>}, {pipeline_mode = #tpu.pipeline_mode<synchronous>, transform_indices = @transform_2, window_bounds = array<i64: 1, 512>}, {transform_indices = @transform_3, window_bounds = array<i64: 1, 4, 1, 1, 4, 4, 16>}]} {
    %c0 = arith.constant 0 : index
    %c0_0 = arith.constant 0 : index
    %0 = vector.load %arg4[%c0, %c0_0] : memref<32x512xf32, #tpu.memory_space<vmem>>, vector<32x512xf32>
    %c0_1 = arith.constant 0 : index
    %c0_2 = arith.constant 0 : index
    %1 = vector.load %arg5[%c0_1, %c0_2] : memref<1x512xf32, #tpu.memory_space<vmem>>, vector<1x512xf32>
    %c0_3 = arith.constant 0 : index
    %c0_4 = arith.constant 0 : index
    %c0_5 = arith.constant 0 : index
    %c0_6 = arith.constant 0 : index
    %c0_7 = arith.constant 0 : index
    %2 = vector.load %arg3[%c0_3, %c0_4, %c0_5, %c0_6, %c0_7] : memref<1x32x1x4x4xf32, #tpu.memory_space<vmem>>, vector<1x32x1x1x4xf32>
    %3 = vector.shape_cast %2 : vector<1x32x1x1x4xf32> to vector<32x4xf32>
    %cst = arith.constant dense<0.000000e+00> : vector<4x512xf32>
    %4 = tpu.matmul %3, %0, %cst {dimension_numbers = #tpu.dot_dimension_numbers<[0], [0], [1], [1], [0, 1, 1, 1], [], []>} : vector<32x4xf32>, vector<32x512xf32>, vector<4x512xf32> -> vector<4x512xf32>
    %5 = vector.broadcast %1 : vector<1x512xf32> to vector<4x512xf32>
    %6 = arith.addf %4, %5 : vector<4x512xf32>
    %7 = vector.shape_cast %6 : vector<4x512xf32> to vector<16x128xf32>
    %8 = tpu.transpose %7, [1, 0] : vector<16x128xf32> -> vector<128x16xf32>
    %9 = vector.extract_strided_slice %8 {offsets = [0, 0], sizes = [4, 16], strides = [1, 1]} : vector<128x16xf32> to vector<4x16xf32>
    %c0_8 = arith.constant 0 : index
    %c0_9 = arith.constant 0 : index
    %c0_10 = arith.constant 0 : index
    %c0_11 = arith.constant 0 : index
    %c0_12 = arith.constant 0 : index
    %c0_13 = arith.constant 0 : index
    %c0_14 = arith.constant 0 : index
    %10 = vector.load %arg6[%c0_8, %c0_9, %c0_10, %c0_11, %c0_12, %c0_13, %c0_14] : memref<1x4x1x1x4x4x16xf32, #tpu.memory_space<vmem>>, vector<1x1x1x1x1x4x16xf32>
    %11 = vector.shape_cast %10 : vector<1x1x1x1x1x4x16xf32> to vector<4x16xf32>
    %12 = vector.shape_cast %9 : vector<4x16xf32> to vector<1x1x1x1x1x4x16xf32>
    tpu.vector_store %arg6[%c0_8, %c0_9, %c0_10, %c0_11, %c0_12, %c0_13, %c0_14], %12 {strides = array<i32>} : memref<1x4x1x1x4x4x16xf32, #tpu.memory_space<vmem>>, vector<1x1x1x1x1x4x16xf32>,
    %13 = vector.extract_strided_slice %8 {offsets = [4, 0], sizes = [4, 16], strides = [1, 1]} : vector<128x16xf32> to vector<4x16xf32>
    %c0_15 = arith.constant 0 : index
    %c1 = arith.constant 1 : index
    %c0_16 = arith.constant 0 : index
    %c0_17 = arith.constant 0 : index
    %c0_18 = arith.constant 0 : index
    %c0_19 = arith.constant 0 : index
    %c0_20 = arith.constant 0 : index
    %14 = vector.load %arg6[%c0_15, %c1, %c0_16, %c0_17, %c0_18, %c0_19, %c0_20] : memref<1x4x1x1x4x4x16xf32, #tpu.memory_space<vmem>>, vector<1x1x1x1x1x4x16xf32>
    %15 = vector.shape_cast %14 : vector<1x1x1x1x1x4x16xf32> to vector<4x16xf32>
    %16 = vector.shape_cast %13 : vector<4x16xf32> to vector<1x1x1x1x1x4x16xf32>
    tpu.vector_store %arg6[%c0_15, %c1, %c0_16, %c0_17, %c0_18, %c0_19, %c0_20], %16 {strides = array<i32>} : memref<1x4x1x1x4x4x16xf32, #tpu.memory_space<vmem>>, vector<1x1x1x1x1x4x16xf32>,
    %17 = vector.extract_strided_slice %8 {offsets = [8, 0], sizes = [4, 16], strides = [1, 1]} : vector<128x16xf32> to vector<4x16xf32>
    %c0_21 = arith.constant 0 : index
    %c2 = arith.constant 2 : index
    %c0_22 = arith.constant 0 : index
    %c0_23 = arith.constant 0 : index
    %c0_24 = arith.constant 0 : index
    %c0_25 = arith.constant 0 : index
    %c0_26 = arith.constant 0 : index
    %18 = vector.load %arg6[%c0_21, %c2, %c0_22, %c0_23, %c0_24, %c0_25, %c0_26] : memref<1x4x1x1x4x4x16xf32, #tpu.memory_space<vmem>>, vector<1x1x1x1x1x4x16xf32>
    %19 = vector.shape_cast %18 : vector<1x1x1x1x1x4x16xf32> to vector<4x16xf32>
    %20 = vector.shape_cast %17 : vector<4x16xf32> to vector<1x1x1x1x1x4x16xf32>
    tpu.vector_store %arg6[%c0_21, %c2, %c0_22, %c0_23, %c0_24, %c0_25, %c0_26], %20 {strides = array<i32>} : memref<1x4x1x1x4x4x16xf32, #tpu.memory_space<vmem>>, vector<1x1x1x1x1x4x16xf32>,
    %21 = vector.extract_strided_slice %8 {offsets = [12, 0], sizes = [4, 16], strides = [1, 1]} : vector<128x16xf32> to vector<4x16xf32>
    %c0_27 = arith.constant 0 : index
    %c3 = arith.constant 3 : index
    %c0_28 = arith.constant 0 : index
    %c0_29 = arith.constant 0 : index
    %c0_30 = arith.constant 0 : index
    %c0_31 = arith.constant 0 : index
    %c0_32 = arith.constant 0 : index
    %22 = vector.load %arg6[%c0_27, %c3, %c0_28, %c0_29, %c0_30, %c0_31, %c0_32] : memref<1x4x1x1x4x4x16xf32, #tpu.memory_space<vmem>>, vector<1x1x1x1x1x4x16xf32>
    %23 = vector.shape_cast %22 : vector<1x1x1x1x1x4x16xf32> to vector<4x16xf32>
    %24 = vector.shape_cast %21 : vector<4x16xf32> to vector<1x1x1x1x1x4x16xf32>
    tpu.vector_store %arg6[%c0_27, %c3, %c0_28, %c0_29, %c0_30, %c0_31, %c0_32], %24 {strides = array<i32>} : memref<1x4x1x1x4x4x16xf32, #tpu.memory_space<vmem>>, vector<1x1x1x1x1x4x16xf32>,
    %c0_33 = arith.constant 0 : index
    %c0_34 = arith.constant 0 : index
    %c0_35 = arith.constant 0 : index
    %c1_36 = arith.constant 1 : index
    %c0_37 = arith.constant 0 : index
    %25 = vector.load %arg3[%c0_33, %c0_34, %c0_35, %c1_36, %c0_37] : memref<1x32x1x4x4xf32, #tpu.memory_space<vmem>>, vector<1x32x1x1x4xf32>
    %26 = vector.shape_cast %25 : vector<1x32x1x1x4xf32> to vector<32x4xf32>
    %cst_38 = arith.constant dense<0.000000e+00> : vector<4x512xf32>
    %27 = tpu.matmul %26, %0, %cst_38 {dimension_numbers = #tpu.dot_dimension_numbers<[0], [0], [1], [1], [0, 1, 1, 1], [], []>} : vector<32x4xf32>, vector<32x512xf32>, vector<4x512xf32> -> vector<4x512xf32>
    %28 = vector.broadcast %1 : vector<1x512xf32> to vector<4x512xf32>
    %29 = arith.addf %27, %28 : vector<4x512xf32>
    %30 = vector.shape_cast %29 : vector<4x512xf32> to vector<16x128xf32>
    %31 = tpu.transpose %30, [1, 0] : vector<16x128xf32> -> vector<128x16xf32>
    %32 = vector.extract_strided_slice %31 {offsets = [0, 0], sizes = [4, 16], strides = [1, 1]} : vector<128x16xf32> to vector<4x16xf32>
    %c0_39 = arith.constant 0 : index
    %c0_40 = arith.constant 0 : index
    %c0_41 = arith.constant 0 : index
    %c0_42 = arith.constant 0 : index
    %c1_43 = arith.constant 1 : index
    %c0_44 = arith.constant 0 : index
    %c0_45 = arith.constant 0 : index
    %33 = vector.load %arg6[%c0_39, %c0_40, %c0_41, %c0_42, %c1_43, %c0_44, %c0_45] : memref<1x4x1x1x4x4x16xf32, #tpu.memory_space<vmem>>, vector<1x1x1x1x1x4x16xf32>
    %34 = vector.shape_cast %33 : vector<1x1x1x1x1x4x16xf32> to vector<4x16xf32>
    %35 = vector.shape_cast %32 : vector<4x16xf32> to vector<1x1x1x1x1x4x16xf32>
    tpu.vector_store %arg6[%c0_39, %c0_40, %c0_41, %c0_42, %c1_43, %c0_44, %c0_45], %35 {strides = array<i32>} : memref<1x4x1x1x4x4x16xf32, #tpu.memory_space<vmem>>, vector<1x1x1x1x1x4x16xf32>,
    %36 = vector.extract_strided_slice %31 {offsets = [4, 0], sizes = [4, 16], strides = [1, 1]} : vector<128x16xf32> to vector<4x16xf32>
    %c0_46 = arith.constant 0 : index
    %c1_47 = arith.constant 1 : index
    %c0_48 = arith.constant 0 : index
    %c0_49 = arith.constant 0 : index
    %c1_50 = arith.constant 1 : index
    %c0_51 = arith.constant 0 : index
    %c0_52 = arith.constant 0 : index
    %37 = vector.load %arg6[%c0_46, %c1_47, %c0_48, %c0_49, %c1_50, %c0_51, %c0_52] : memref<1x4x1x1x4x4x16xf32, #tpu.memory_space<vmem>>, vector<1x1x1x1x1x4x16xf32>
    %38 = vector.shape_cast %37 : vector<1x1x1x1x1x4x16xf32> to vector<4x16xf32>
    %39 = vector.shape_cast %36 : vector<4x16xf32> to vector<1x1x1x1x1x4x16xf32>
    tpu.vector_store %arg6[%c0_46, %c1_47, %c0_48, %c0_49, %c1_50, %c0_51, %c0_52], %39 {strides = array<i32>} : memref<1x4x1x1x4x4x16xf32, #tpu.memory_space<vmem>>, vector<1x1x1x1x1x4x16xf32>,
    %40 = vector.extract_strided_slice %31 {offsets = [8, 0], sizes = [4, 16], strides = [1, 1]} : vector<128x16xf32> to vector<4x16xf32>
    %c0_53 = arith.constant 0 : index
    %c2_54 = arith.constant 2 : index
    %c0_55 = arith.constant 0 : index
    %c0_56 = arith.constant 0 : index
    %c1_57 = arith.constant 1 : index
    %c0_58 = arith.constant 0 : index
    %c0_59 = arith.constant 0 : index
    %41 = vector.load %arg6[%c0_53, %c2_54, %c0_55, %c0_56, %c1_57, %c0_58, %c0_59] : memref<1x4x1x1x4x4x16xf32, #tpu.memory_space<vmem>>, vector<1x1x1x1x1x4x16xf32>
    %42 = vector.shape_cast %41 : vector<1x1x1x1x1x4x16xf32> to vector<4x16xf32>
    %43 = vector.shape_cast %40 : vector<4x16xf32> to vector<1x1x1x1x1x4x16xf32>
    tpu.vector_store %arg6[%c0_53, %c2_54, %c0_55, %c0_56, %c1_57, %c0_58, %c0_59], %43 {strides = array<i32>} : memref<1x4x1x1x4x4x16xf32, #tpu.memory_space<vmem>>, vector<1x1x1x1x1x4x16xf32>,
    %44 = vector.extract_strided_slice %31 {offsets = [12, 0], sizes = [4, 16], strides = [1, 1]} : vector<128x16xf32> to vector<4x16xf32>
    %c0_60 = arith.constant 0 : index
    %c3_61 = arith.constant 3 : index
    %c0_62 = arith.constant 0 : index
    %c0_63 = arith.constant 0 : index
    %c1_64 = arith.constant 1 : index
    %c0_65 = arith.constant 0 : index
    %c0_66 = arith.constant 0 : index
    %45 = vector.load %arg6[%c0_60, %c3_61, %c0_62, %c0_63, %c1_64, %c0_65, %c0_66] : memref<1x4x1x1x4x4x16xf32, #tpu.memory_space<vmem>>, vector<1x1x1x1x1x4x16xf32>
    %46 = vector.shape_cast %45 : vector<1x1x1x1x1x4x16xf32> to vector<4x16xf32>
    %47 = vector.shape_cast %44 : vector<4x16xf32> to vector<1x1x1x1x1x4x16xf32>
    tpu.vector_store %arg6[%c0_60, %c3_61, %c0_62, %c0_63, %c1_64, %c0_65, %c0_66], %47 {strides = array<i32>} : memref<1x4x1x1x4x4x16xf32, #tpu.memory_space<vmem>>, vector<1x1x1x1x1x4x16xf32>,
    %c0_67 = arith.constant 0 : index
    %c0_68 = arith.constant 0 : index
    %c0_69 = arith.constant 0 : index
    %c2_70 = arith.constant 2 : index
    %c0_71 = arith.constant 0 : index
    %48 = vector.load %arg3[%c0_67, %c0_68, %c0_69, %c2_70, %c0_71] : memref<1x32x1x4x4xf32, #tpu.memory_space<vmem>>, vector<1x32x1x1x4xf32>
    %49 = vector.shape_cast %48 : vector<1x32x1x1x4xf32> to vector<32x4xf32>
    %cst_72 = arith.constant dense<0.000000e+00> : vector<4x512xf32>
    %50 = tpu.matmul %49, %0, %cst_72 {dimension_numbers = #tpu.dot_dimension_numbers<[0], [0], [1], [1], [0, 1, 1, 1], [], []>} : vector<32x4xf32>, vector<32x512xf32>, vector<4x512xf32> -> vector<4x512xf32>
    %51 = vector.broadcast %1 : vector<1x512xf32> to vector<4x512xf32>
    %52 = arith.addf %50, %51 : vector<4x512xf32>
    %53 = vector.shape_cast %52 : vector<4x512xf32> to vector<16x128xf32>
    %54 = tpu.transpose %53, [1, 0] : vector<16x128xf32> -> vector<128x16xf32>
    %55 = vector.extract_strided_slice %54 {offsets = [0, 0], sizes = [4, 16], strides = [1, 1]} : vector<128x16xf32> to vector<4x16xf32>
    %c0_73 = arith.constant 0 : index
    %c0_74 = arith.constant 0 : index
    %c0_75 = arith.constant 0 : index
    %c0_76 = arith.constant 0 : index
    %c2_77 = arith.constant 2 : index
    %c0_78 = arith.constant 0 : index
    %c0_79 = arith.constant 0 : index
    %56 = vector.load %arg6[%c0_73, %c0_74, %c0_75, %c0_76, %c2_77, %c0_78, %c0_79] : memref<1x4x1x1x4x4x16xf32, #tpu.memory_space<vmem>>, vector<1x1x1x1x1x4x16xf32>
    %57 = vector.shape_cast %56 : vector<1x1x1x1x1x4x16xf32> to vector<4x16xf32>
    %58 = vector.shape_cast %55 : vector<4x16xf32> to vector<1x1x1x1x1x4x16xf32>
    tpu.vector_store %arg6[%c0_73, %c0_74, %c0_75, %c0_76, %c2_77, %c0_78, %c0_79], %58 {strides = array<i32>} : memref<1x4x1x1x4x4x16xf32, #tpu.memory_space<vmem>>, vector<1x1x1x1x1x4x16xf32>,
    %59 = vector.extract_strided_slice %54 {offsets = [4, 0], sizes = [4, 16], strides = [1, 1]} : vector<128x16xf32> to vector<4x16xf32>
    %c0_80 = arith.constant 0 : index
    %c1_81 = arith.constant 1 : index
    %c0_82 = arith.constant 0 : index
    %c0_83 = arith.constant 0 : index
    %c2_84 = arith.constant 2 : index
    %c0_85 = arith.constant 0 : index
    %c0_86 = arith.constant 0 : index
    %60 = vector.load %arg6[%c0_80, %c1_81, %c0_82, %c0_83, %c2_84, %c0_85, %c0_86] : memref<1x4x1x1x4x4x16xf32, #tpu.memory_space<vmem>>, vector<1x1x1x1x1x4x16xf32>
    %61 = vector.shape_cast %60 : vector<1x1x1x1x1x4x16xf32> to vector<4x16xf32>
    %62 = vector.shape_cast %59 : vector<4x16xf32> to vector<1x1x1x1x1x4x16xf32>
    tpu.vector_store %arg6[%c0_80, %c1_81, %c0_82, %c0_83, %c2_84, %c0_85, %c0_86], %62 {strides = array<i32>} : memref<1x4x1x1x4x4x16xf32, #tpu.memory_space<vmem>>, vector<1x1x1x1x1x4x16xf32>,
    %63 = vector.extract_strided_slice %54 {offsets = [8, 0], sizes = [4, 16], strides = [1, 1]} : vector<128x16xf32> to vector<4x16xf32>
    %c0_87 = arith.constant 0 : index
    %c2_88 = arith.constant 2 : index
    %c0_89 = arith.constant 0 : index
    %c0_90 = arith.constant 0 : index
    %c2_91 = arith.constant 2 : index
    %c0_92 = arith.constant 0 : index
    %c0_93 = arith.constant 0 : index
    %64 = vector.load %arg6[%c0_87, %c2_88, %c0_89, %c0_90, %c2_91, %c0_92, %c0_93] : memref<1x4x1x1x4x4x16xf32, #tpu.memory_space<vmem>>, vector<1x1x1x1x1x4x16xf32>
    %65 = vector.shape_cast %64 : vector<1x1x1x1x1x4x16xf32> to vector<4x16xf32>
    %66 = vector.shape_cast %63 : vector<4x16xf32> to vector<1x1x1x1x1x4x16xf32>
    tpu.vector_store %arg6[%c0_87, %c2_88, %c0_89, %c0_90, %c2_91, %c0_92, %c0_93], %66 {strides = array<i32>} : memref<1x4x1x1x4x4x16xf32, #tpu.memory_space<vmem>>, vector<1x1x1x1x1x4x16xf32>,
    %67 = vector.extract_strided_slice %54 {offsets = [12, 0], sizes = [4, 16], strides = [1, 1]} : vector<128x16xf32> to vector<4x16xf32>
    %c0_94 = arith.constant 0 : index
    %c3_95 = arith.constant 3 : index
    %c0_96 = arith.constant 0 : index
    %c0_97 = arith.constant 0 : index
    %c2_98 = arith.constant 2 : index
    %c0_99 = arith.constant 0 : index
    %c0_100 = arith.constant 0 : index
    %68 = vector.load %arg6[%c0_94, %c3_95, %c0_96, %c0_97, %c2_98, %c0_99, %c0_100] : memref<1x4x1x1x4x4x16xf32, #tpu.memory_space<vmem>>, vector<1x1x1x1x1x4x16xf32>
    %69 = vector.shape_cast %68 : vector<1x1x1x1x1x4x16xf32> to vector<4x16xf32>
    %70 = vector.shape_cast %67 : vector<4x16xf32> to vector<1x1x1x1x1x4x16xf32>
    tpu.vector_store %arg6[%c0_94, %c3_95, %c0_96, %c0_97, %c2_98, %c0_99, %c0_100], %70 {strides = array<i32>} : memref<1x4x1x1x4x4x16xf32, #tpu.memory_space<vmem>>, vector<1x1x1x1x1x4x16xf32>,
    %c0_101 = arith.constant 0 : index
    %c0_102 = arith.constant 0 : index
    %c0_103 = arith.constant 0 : index
    %c3_104 = arith.constant 3 : index
    %c0_105 = arith.constant 0 : index
    %71 = vector.load %arg3[%c0_101, %c0_102, %c0_103, %c3_104, %c0_105] : memref<1x32x1x4x4xf32, #tpu.memory_space<vmem>>, vector<1x32x1x1x4xf32>
    %72 = vector.shape_cast %71 : vector<1x32x1x1x4xf32> to vector<32x4xf32>
    %cst_106 = arith.constant dense<0.000000e+00> : vector<4x512xf32>
    %73 = tpu.matmul %72, %0, %cst_106 {dimension_numbers = #tpu.dot_dimension_numbers<[0], [0], [1], [1], [0, 1, 1, 1], [], []>} : vector<32x4xf32>, vector<32x512xf32>, vector<4x512xf32> -> vector<4x512xf32>
    %74 = vector.broadcast %1 : vector<1x512xf32> to vector<4x512xf32>
    %75 = arith.addf %73, %74 : vector<4x512xf32>
    %76 = vector.shape_cast %75 : vector<4x512xf32> to vector<16x128xf32>
    %77 = tpu.transpose %76, [1, 0] : vector<16x128xf32> -> vector<128x16xf32>
    %78 = vector.extract_strided_slice %77 {offsets = [0, 0], sizes = [4, 16], strides = [1, 1]} : vector<128x16xf32> to vector<4x16xf32>
    %c0_107 = arith.constant 0 : index
    %c0_108 = arith.constant 0 : index
    %c0_109 = arith.constant 0 : index
    %c0_110 = arith.constant 0 : index
    %c3_111 = arith.constant 3 : index
    %c0_112 = arith.constant 0 : index
    %c0_113 = arith.constant 0 : index
    %79 = vector.load %arg6[%c0_107, %c0_108, %c0_109, %c0_110, %c3_111, %c0_112, %c0_113] : memref<1x4x1x1x4x4x16xf32, #tpu.memory_space<vmem>>, vector<1x1x1x1x1x4x16xf32>
    %80 = vector.shape_cast %79 : vector<1x1x1x1x1x4x16xf32> to vector<4x16xf32>
    %81 = vector.shape_cast %78 : vector<4x16xf32> to vector<1x1x1x1x1x4x16xf32>
    tpu.vector_store %arg6[%c0_107, %c0_108, %c0_109, %c0_110, %c3_111, %c0_112, %c0_113], %81 {strides = array<i32>} : memref<1x4x1x1x4x4x16xf32, #tpu.memory_space<vmem>>, vector<1x1x1x1x1x4x16xf32>,
    %82 = vector.extract_strided_slice %77 {offsets = [4, 0], sizes = [4, 16], strides = [1, 1]} : vector<128x16xf32> to vector<4x16xf32>
    %c0_114 = arith.constant 0 : index
    %c1_115 = arith.constant 1 : index
    %c0_116 = arith.constant 0 : index
    %c0_117 = arith.constant 0 : index
    %c3_118 = arith.constant 3 : index
    %c0_119 = arith.constant 0 : index
    %c0_120 = arith.constant 0 : index
    %83 = vector.load %arg6[%c0_114, %c1_115, %c0_116, %c0_117, %c3_118, %c0_119, %c0_120] : memref<1x4x1x1x4x4x16xf32, #tpu.memory_space<vmem>>, vector<1x1x1x1x1x4x16xf32>
    %84 = vector.shape_cast %83 : vector<1x1x1x1x1x4x16xf32> to vector<4x16xf32>
    %85 = vector.shape_cast %82 : vector<4x16xf32> to vector<1x1x1x1x1x4x16xf32>
    tpu.vector_store %arg6[%c0_114, %c1_115, %c0_116, %c0_117, %c3_118, %c0_119, %c0_120], %85 {strides = array<i32>} : memref<1x4x1x1x4x4x16xf32, #tpu.memory_space<vmem>>, vector<1x1x1x1x1x4x16xf32>,
    %86 = vector.extract_strided_slice %77 {offsets = [8, 0], sizes = [4, 16], strides = [1, 1]} : vector<128x16xf32> to vector<4x16xf32>
    %c0_121 = arith.constant 0 : index
    %c2_122 = arith.constant 2 : index
    %c0_123 = arith.constant 0 : index
    %c0_124 = arith.constant 0 : index
    %c3_125 = arith.constant 3 : index
    %c0_126 = arith.constant 0 : index
    %c0_127 = arith.constant 0 : index
    %87 = vector.load %arg6[%c0_121, %c2_122, %c0_123, %c0_124, %c3_125, %c0_126, %c0_127] : memref<1x4x1x1x4x4x16xf32, #tpu.memory_space<vmem>>, vector<1x1x1x1x1x4x16xf32>
    %88 = vector.shape_cast %87 : vector<1x1x1x1x1x4x16xf32> to vector<4x16xf32>
    %89 = vector.shape_cast %86 : vector<4x16xf32> to vector<1x1x1x1x1x4x16xf32>
    tpu.vector_store %arg6[%c0_121, %c2_122, %c0_123, %c0_124, %c3_125, %c0_126, %c0_127], %89 {strides = array<i32>} : memref<1x4x1x1x4x4x16xf32, #tpu.memory_space<vmem>>, vector<1x1x1x1x1x4x16xf32>,
    %90 = vector.extract_strided_slice %77 {offsets = [12, 0], sizes = [4, 16], strides = [1, 1]} : vector<128x16xf32> to vector<4x16xf32>
    %c0_128 = arith.constant 0 : index
    %c3_129 = arith.constant 3 : index
    %c0_130 = arith.constant 0 : index
    %c0_131 = arith.constant 0 : index
    %c3_132 = arith.constant 3 : index
    %c0_133 = arith.constant 0 : index
    %c0_134 = arith.constant 0 : index
    %91 = vector.load %arg6[%c0_128, %c3_129, %c0_130, %c0_131, %c3_132, %c0_133, %c0_134] : memref<1x4x1x1x4x4x16xf32, #tpu.memory_space<vmem>>, vector<1x1x1x1x1x4x16xf32>
    %92 = vector.shape_cast %91 : vector<1x1x1x1x1x4x16xf32> to vector<4x16xf32>
    %93 = vector.shape_cast %90 : vector<4x16xf32> to vector<1x1x1x1x1x4x16xf32>
    tpu.vector_store %arg6[%c0_128, %c3_129, %c0_130, %c0_131, %c3_132, %c0_133, %c0_134], %93 {strides = array<i32>} : memref<1x4x1x1x4x4x16xf32, #tpu.memory_space<vmem>>, vector<1x1x1x1x1x4x16xf32>,
    return
  }
  func.func @transform_0(%arg0: i32, %arg1: i32, %arg2: i32) -> (i32, i32, i32, i32, i32) {
    %c0_i32 = arith.constant 0 : i32
    %c0_i32_0 = arith.constant 0 : i32
    %c0_i32_1 = arith.constant 0 : i32
    return %arg0, %c0_i32, %arg1, %arg2, %c0_i32_0 : i32, i32, i32, i32, i32
  }
  func.func @transform_1(%arg0: i32, %arg1: i32, %arg2: i32) -> (i32, i32) {
    %c0_i32 = arith.constant 0 : i32
    %c0_i32_0 = arith.constant 0 : i32
    %c0_i32_1 = arith.constant 0 : i32
    return %c0_i32, %c0_i32_0 : i32, i32
  }
  func.func @transform_2(%arg0: i32, %arg1: i32, %arg2: i32) -> (i32, i32) {
    %c0_i32 = arith.constant 0 : i32
    %c0_i32_0 = arith.constant 0 : i32
    %c0_i32_1 = arith.constant 0 : i32
    return %c0_i32, %c0_i32_0 : i32, i32
  }
  func.func @transform_3(%arg0: i32, %arg1: i32, %arg2: i32) -> (i32, i32, i32, i32, i32, i32, i32) {
    %c0_i32 = arith.constant 0 : i32
    %c0_i32_0 = arith.constant 0 : i32
    %c0_i32_1 = arith.constant 0 : i32
    %c0_i32_2 = arith.constant 0 : i32
    %c0_i32_3 = arith.constant 0 : i32
    return %arg0, %c0_i32, %arg1, %c0_i32_0, %arg2, %c0_i32_1, %c0_i32_2 : i32, i32, i32, i32, i32, i32, i32
  }
}

</mosaic_0001>

<llo_original>
// kernel: tpu_custom_call.1
$region0: #{tpu_custom_call.1}
  #allocation0 [shape = 'u32[]', space=smem, size = 0x4, offset = 0x4, fixed_abs, tag = 'smem constant byte address 0x4 - core index']
  #allocation1 [shape = 'u32[144,128]{1,0:T(1,128)}', space=vmem, size = 0x12000, scoped, tag = 'internal scratch']
  #allocation5 [shape = 's32[]', space=sflag, size = 0x4, offset = 0, fixed_abs, tag = 'sflag constant byte address 0x0 - dummy sync flag']
  %s0 = inlined_call_operand.vmem [shape: f32[2,32,2,4,4], index: 0, kind: input, shape index: {}]
  %s1 = inlined_call_operand.vmem [shape: f32[32,512], index: 1, kind: input, shape index: {}]
  %s2 = inlined_call_operand.vmem [shape: f32[1,512], index: 2, kind: input, shape index: {}]
  %s3 = inlined_call_operand.hbm [shape: f32[2,4,2,1,4,4,16], index: 3, kind: output, shape index: {}]
  %s4 = sld [smem:[#allocation0]]
  $region86: #{tpu_custom_call.1} parent=0
    _
  %s6 = ssub.s32 1, %s4
  %s7 = scalar_select 0, %s6, %s4
  $region1: #{tpu_custom_call.1} parent=0
    #allocation2 [shape = 'u8[131072]{0}', space=vmem, size = 0x20000, scoped, tag = 'input window, operand 0']
    #allocation3 [shape = 'u8[65536]{0}', space=vmem, size = 0x10000, scoped, tag = 'output window, operand 0']
    #allocation4 [shape = 's32[2]{0}', space=sflag, size = 0x8, scoped, tag = 'scoped memory for tpu_custom_call.1']
    %8 = vsyncpa [#allocation4], 0
    %s9 = scalar_lea.sflag [#allocation4], 1
    %10 = vsyncpa %s9, 0
    loop: start=0, step=1, limit=6
    $region2: #{tpu_custom_call.1} parent=1 // loop_pre_header
      _
    $region3: #{tpu_custom_call.1} parent=1 // loop_header
      %s12 = sphi 0, %s16
      %p13 = scmp.ge.s32.totalorder %s12, 6
      %s19 = sphi 0, %s38
      %s20 = sphi 0, %s34
      %s21 = sphi 0, %s30
      %s22 = sphi 0, %s19
      %s23 = sphi 0, %s20
      %s24 = sphi 0, %s21
      %s25 = sphi 0, %s22
      %s26 = sphi 0, %s23
      %s27 = sphi 0, %s24
      %s45 = sphi 0, %s47
      %s48 = sphi 0, %s45
      %s49 = sphi 0, %s48
      %s65 = sphi 0, %s49
      %s69 = sphi 0, %s69
      %s71 = sphi 0, %s69
      %s72 = sphi 0, %s71
      %s86 = sphi 0, %s72
      %s90 = sphi 0, %s90
      %s92 = sphi 0, %s90
      %s93 = sphi 0, %s92
      %s107 = sphi 0, %s93
      %s117 = sphi 0, %s119
      %s120 = sphi 0, %s117
      %s121 = sphi 0, %s120
      %s137 = sphi 0, %s121
    $region4: #{tpu_custom_call.1} parent=1 // loop_header_branch
      %15 = sbr.rel (%p13) target = $region8
    $region5: #{tpu_custom_call.1} parent=1 // loop_body
      %s17 = ssub.s32 %s12, 1
      %s18 = ssub.s32 %s12, 2
      %s28 = sadd.s32 1, %s21
      %p29 = scmp.ge.s32.totalorder %s28, 1
      %s30 = scalar_select %p29, 0, %s28
      %s31 = sadd.s32 1, %s20
      %s32 = scalar_select %p29, %s31, %s20
      %p33 = scmp.ge.s32.totalorder %s32, 2
      %s34 = scalar_select %p33, 0, %s32
      %s35 = sadd.s32 1, %s19
      %s36 = scalar_select %p33, %s35, %s19
      %p37 = scmp.ge.s32.totalorder %s36, 2
      %s38 = scalar_select %p37, 0, %s36
      %s39 = ssub.s32 %s19, %s38
      %s40 = ssub.s32 %s20, %s34
      %s41 = sor.u32 %s39, %s40
      %s42 = ssub.s32 %s21, %s30
      %s43 = sor.u32 %s41, %s42
      %p44 = scmp.eq.s32.totalorder %s43, 0
      %s46 = sadd.s32 %s45, 1
      %s47 = scalar_select %p44, %s45, %s46
      %p50 = pneg %p44
      %p51 = scmp.eq.s32.totalorder %s12, 3
      %p52 = por %p50, %p51
      %p53 = scmp.ne.s32.totalorder %s45, %s48
      %p54 = scmp.eq.s32.totalorder %s12, 0
      %p55 = por %p53, %p54
      %p56 = scmp.ne.s32.totalorder %s45, %s48
      %p57 = scmp.eq.s32.totalorder %s17, 3
      %p58 = por %p56, %p57
      %p59 = scmp.ne.s32.totalorder %s48, %s49
      %p60 = scmp.eq.s32.totalorder %s17, 0
      %p61 = por %p59, %p60
      %p62 = scmp.ne.s32.totalorder %s48, %s49
      %p63 = scmp.eq.s32.totalorder %s18, 3
      %p64 = por %p62, %p63
      %p66 = scmp.ne.s32.totalorder %s49, %s65
      %p67 = scmp.eq.s32.totalorder %s18, 0
      %p68 = por %p66, %p67
      %s70 = sadd.s32 %s69, 1
      %p73 = scmp.eq.s32.totalorder %s12, 3
      %p74 = scmp.ne.s32.totalorder %s69, %s71
      %p75 = scmp.eq.s32.totalorder %s12, 0
      %p76 = por %p74, %p75
      %p77 = scmp.ne.s32.totalorder %s69, %s71
      %p78 = scmp.eq.s32.totalorder %s17, 3
      %p79 = por %p77, %p78
      %p80 = scmp.ne.s32.totalorder %s71, %s72
      %p81 = scmp.eq.s32.totalorder %s17, 0
      %p82 = por %p80, %p81
      %p83 = scmp.ne.s32.totalorder %s71, %s72
      %p84 = scmp.eq.s32.totalorder %s18, 3
      %p85 = por %p83, %p84
      %p87 = scmp.ne.s32.totalorder %s72, %s86
      %p88 = scmp.eq.s32.totalorder %s18, 0
      %p89 = por %p87, %p88
      %s91 = sadd.s32 %s90, 1
      %p94 = scmp.eq.s32.totalorder %s12, 3
      %p95 = scmp.ne.s32.totalorder %s90, %s92
      %p96 = scmp.eq.s32.totalorder %s12, 0
      %p97 = por %p95, %p96
      %p98 = scmp.ne.s32.totalorder %s90, %s92
      %p99 = scmp.eq.s32.totalorder %s17, 3
      %p100 = por %p98, %p99
      %p101 = scmp.ne.s32.totalorder %s92, %s93
      %p102 = scmp.eq.s32.totalorder %s17, 0
      %p103 = por %p101, %p102
      %p104 = scmp.ne.s32.totalorder %s92, %s93
      %p105 = scmp.eq.s32.totalorder %s18, 3
      %p106 = por %p104, %p105
      %p108 = scmp.ne.s32.totalorder %s93, %s107
      %p109 = scmp.eq.s32.totalorder %s18, 0
      %p110 = por %p108, %p109
      %s111 = ssub.s32 %s19, %s38
      %s112 = ssub.s32 %s20, %s34
      %s113 = sor.u32 %s111, %s112
      %s114 = ssub.s32 %s21, %s30
      %s115 = sor.u32 %s113, %s114
      %p116 = scmp.eq.s32.totalorder %s115, 0
      %s118 = sadd.s32 %s117, 1
      %s119 = scalar_select %p116, %s117, %s118
      %p122 = pneg %p116
      %p123 = scmp.eq.s32.totalorder %s12, 3
      %p124 = por %p122, %p123
      %p125 = scmp.ne.s32.totalorder %s117, %s120
      %p126 = scmp.eq.s32.totalorder %s12, 0
      %p127 = por %p125, %p126
      %p128 = scmp.ne.s32.totalorder %s117, %s120
      %p129 = scmp.eq.s32.totalorder %s17, 3
      %p130 = por %p128, %p129
      %p131 = scmp.ne.s32.totalorder %s120, %s121
      %p132 = scmp.eq.s32.totalorder %s17, 0
      %p133 = por %p131, %p132
      %p134 = scmp.ne.s32.totalorder %s120, %s121
      %p135 = scmp.eq.s32.totalorder %s18, 3
      %p136 = por %p134, %p135
      %p138 = scmp.ne.s32.totalorder %s121, %s137
      %p139 = scmp.eq.s32.totalorder %s18, 0
      %p140 = por %p138, %p139
      %p141 = scmp.le.s32.totalorder 1, %s12
      %p142 = scmp.lt.s32.totalorder %s12, 5
      %p143 = pnand %p141, %p142
      %p144 = pneg %p143
      // Predicated region
      $region9: #{tpu_custom_call.1} parent=5 // pred_check
        _
      $region10: #{tpu_custom_call.1} parent=5 // pred_check_branch
        %146 = sbr.rel (%p143) target = $region12
      $region11: #{tpu_custom_call.1} parent=5 // pred_region
        %s147 = ssub.s32 %s12, 1
        // Predicated region
        $region13: #{tpu_custom_call.1} parent=11 // pred_check
          %p148 = pneg %p82
        $region14: #{tpu_custom_call.1} parent=11 // pred_check_branch
          %150 = sbr.rel (%p148) target = $region16
        $region15: #{tpu_custom_call.1} parent=11 // pred_region
          _
        $region16: #{tpu_custom_call.1} parent=11 // pred_fallthru
          _
        // Predicated region
        $region17: #{tpu_custom_call.1} parent=11 // pred_check
          %p151 = pneg %p103
        $region18: #{tpu_custom_call.1} parent=11 // pred_check_branch
          %153 = sbr.rel (%p151) target = $region20
        $region19: #{tpu_custom_call.1} parent=11 // pred_region
          _
        $region20: #{tpu_custom_call.1} parent=11 // pred_fallthru
          _
      $region12: #{tpu_custom_call.1} parent=5 // pred_fallthru
        _
      %p154 = scmp.lt.s32.totalorder %s12, 4
      // Predicated region
      $region21: #{tpu_custom_call.1} parent=5 // pred_check
        %p155 = pneg %p154
      $region22: #{tpu_custom_call.1} parent=5 // pred_check_branch
        %157 = sbr.rel (%p155) target = $region24
      $region23: #{tpu_custom_call.1} parent=5 // pred_region
        // Predicated region
        $region25: #{tpu_custom_call.1} parent=23 // pred_check
          %p158 = pneg %p55
        $region26: #{tpu_custom_call.1} parent=23 // pred_check_branch
          %160 = sbr.rel (%p158) target = $region28
        $region27: #{tpu_custom_call.1} parent=23 // pred_region
          %s161 = sand.u32 %s45, 1
          %s162 = sand.u32 %s45, 1
          %s163 = smul.addr %s162, 128
          %s164 = scalar_lea.vmem [#allocation2], %s163
          %s165 = sadd.s32 %s21, %s20
          %s166 = smul.addr %s19, 64
          %s167 = sadd.s32 %s165, %s166
          %s168 = smul.addr %s167, 4
          %s169 = scalar_lea.vmem %s0, %s168
          // Predicated region
          $region29: #{tpu_custom_call.1} parent=27 // pred_check
            _
          $region30: #{tpu_custom_call.1} parent=27 // pred_check_branch
            %171 = sbr.rel (0) target = $region32
          $region31: #{tpu_custom_call.1} parent=27 // pred_region
            // Predicated region
            $region33: #{tpu_custom_call.1} parent=31 // pred_check
              _
            $region34: #{tpu_custom_call.1} parent=31 // pred_check_branch
              %173 = sbr.rel target = $region36
            $region35: #{tpu_custom_call.1} parent=31 // pred_region
              // Predicated region
              $region48: #{tpu_custom_call.1} parent=35 // pred_check
                _
              $region49: #{tpu_custom_call.1} parent=35 // pred_check_branch
                %250 = sbr.rel (0) target = $region51
              $region50: #{tpu_custom_call.1} parent=35 // pred_region
                loop: start=0, step=1, limit=1
                $region52: #{tpu_custom_call.1} parent=50 // loop_pre_header
                  _
                $region53: #{tpu_custom_call.1} parent=50 // loop_header
                  %s252 = sphi 0, %s256
                  %p253 = scmp.ge.s32.totalorder %s252, 1
                  %s257 = sphi %s169, %s169
                  %s258 = sphi %s164, %s164
                $region54: #{tpu_custom_call.1} parent=50 // loop_header_branch
                  %255 = sbr.rel (%p253) target = $region58
                $region55: #{tpu_custom_call.1} parent=50 // loop_body
                  _
                $region56: #{tpu_custom_call.1} parent=50 // loop_footer
                  %s256 = sadd.s32 1, %s252
                $region57: #{tpu_custom_call.1} parent=50 // loop_footer_branch
                  %251 = sbr.rel target = $region53
                $region58: #{tpu_custom_call.1} parent=50 // loop_exit
                  _
                loop: start=0, step=1, limit=1
                $region59: #{tpu_custom_call.1} parent=50 // loop_pre_header
                  _
                $region60: #{tpu_custom_call.1} parent=50 // loop_header
                  %s261 = sphi 0, %s265
                  %p262 = scmp.ge.s32.totalorder %s261, 1
                  %s266 = sphi %s169, %s169
                  %s267 = sphi %s164, %s164
                $region61: #{tpu_custom_call.1} parent=50 // loop_header_branch
                  %264 = sbr.rel (%p262) target = $region65
                $region62: #{tpu_custom_call.1} parent=50 // loop_body
                  %v268 = vld [vmem:[%s266] sm:$0xf]
                  %269 = vst [vmem:[%s267] sm:$0xf] %v268
                  %v270 = vld [vmem:[%s266 + $0x8] sm:$0xf]
                  %271 = vst [vmem:[%s267 + $0x4] sm:$0xf] %v270
                  %v272 = vld [vmem:[%s266 + $0x10] sm:$0xf]
                  %273 = vst [vmem:[%s267 + $0x8] sm:$0xf] %v272
                  %v274 = vld [vmem:[%s266 + $0x18] sm:$0xf]
                  %275 = vst [vmem:[%s267 + $0xc] sm:$0xf] %v274
                  %v276 = vld [vmem:[%s266 + $0x20] sm:$0xf]
                  %277 = vst [vmem:[%s267 + $0x10] sm:$0xf] %v276
                  %v278 = vld [vmem:[%s266 + $0x28] sm:$0xf]
                  %279 = vst [vmem:[%s267 + $0x14] sm:$0xf] %v278
                  %v280 = vld [vmem:[%s266 + $0x30] sm:$0xf]
                  %281 = vst [vmem:[%s267 + $0x18] sm:$0xf] %v280
                  %v282 = vld [vmem:[%s266 + $0x38] sm:$0xf]
                  %283 = vst [vmem:[%s267 + $0x1c] sm:$0xf] %v282
                  %v284 = vld [vmem:[%s266 + $0x40] sm:$0xf]
                  %285 = vst [vmem:[%s267 + $0x20] sm:$0xf] %v284
                  %v286 = vld [vmem:[%s266 + $0x48] sm:$0xf]
                  %287 = vst [vmem:[%s267 + $0x24] sm:$0xf] %v286
                  %v288 = vld [vmem:[%s266 + $0x50] sm:$0xf]
                  %289 = vst [vmem:[%s267 + $0x28] sm:$0xf] %v288
                  %v290 = vld [vmem:[%s266 + $0x58] sm:$0xf]
                  %291 = vst [vmem:[%s267 + $0x2c] sm:$0xf] %v290
                  %v292 = vld [vmem:[%s266 + $0x60] sm:$0xf]
                  %293 = vst [vmem:[%s267 + $0x30] sm:$0xf] %v292
                  %v294 = vld [vmem:[%s266 + $0x68] sm:$0xf]
                  %295 = vst [vmem:[%s267 + $0x34] sm:$0xf] %v294
                  %v296 = vld [vmem:[%s266 + $0x70] sm:$0xf]
                  %297 = vst [vmem:[%s267 + $0x38] sm:$0xf] %v296
                  %v298 = vld [vmem:[%s266 + $0x78] sm:$0xf]
                  %299 = vst [vmem:[%s267 + $0x3c] sm:$0xf] %v298
                  %v300 = vld [vmem:[%s266 + $0x80] sm:$0xf]
                  %301 = vst [vmem:[%s267 + $0x40] sm:$0xf] %v300
                  %v302 = vld [vmem:[%s266 + $0x88] sm:$0xf]
                  %303 = vst [vmem:[%s267 + $0x44] sm:$0xf] %v302
                  %v304 = vld [vmem:[%s266 + $0x90] sm:$0xf]
                  %305 = vst [vmem:[%s267 + $0x48] sm:$0xf] %v304
                  %v306 = vld [vmem:[%s266 + $0x98] sm:$0xf]
                  %307 = vst [vmem:[%s267 + $0x4c] sm:$0xf] %v306
                  %v308 = vld [vmem:[%s266 + $0xa0] sm:$0xf]
                  %309 = vst [vmem:[%s267 + $0x50] sm:$0xf] %v308
                  %v310 = vld [vmem:[%s266 + $0xa8] sm:$0xf]
                  %311 = vst [vmem:[%s267 + $0x54] sm:$0xf] %v310
                  %v312 = vld [vmem:[%s266 + $0xb0] sm:$0xf]
                  %313 = vst [vmem:[%s267 + $0x58] sm:$0xf] %v312
                  %v314 = vld [vmem:[%s266 + $0xb8] sm:$0xf]
                  %315 = vst [vmem:[%s267 + $0x5c] sm:$0xf] %v314
                  %v316 = vld [vmem:[%s266 + $0xc0] sm:$0xf]
                  %317 = vst [vmem:[%s267 + $0x60] sm:$0xf] %v316
                  %v318 = vld [vmem:[%s266 + $0xc8] sm:$0xf]
                  %319 = vst [vmem:[%s267 + $0x64] sm:$0xf] %v318
                  %v320 = vld [vmem:[%s266 + $0xd0] sm:$0xf]
                  %321 = vst [vmem:[%s267 + $0x68] sm:$0xf] %v320
                  %v322 = vld [vmem:[%s266 + $0xd8] sm:$0xf]
                  %323 = vst [vmem:[%s267 + $0x6c] sm:$0xf] %v322
                  %v324 = vld [vmem:[%s266 + $0xe0] sm:$0xf]
                  %325 = vst [vmem:[%s267 + $0x70] sm:$0xf] %v324
                  %v326 = vld [vmem:[%s266 + $0xe8] sm:$0xf]
                  %327 = vst [vmem:[%s267 + $0x74] sm:$0xf] %v326
                  %v328 = vld [vmem:[%s266 + $0xf0] sm:$0xf]
                  %329 = vst [vmem:[%s267 + $0x78] sm:$0xf] %v328
                  %v330 = vld [vmem:[%s266 + $0xf8] sm:$0xf]
                  %331 = vst [vmem:[%s267 + $0x7c] sm:$0xf] %v330
                $region63: #{tpu_custom_call.1} parent=50 // loop_footer
                  %s265 = sadd.s32 1, %s261
                $region64: #{tpu_custom_call.1} parent=50 // loop_footer_branch
                  %260 = sbr.rel target = $region60
                $region65: #{tpu_custom_call.1} parent=50 // loop_exit
                  _
              $region51: #{tpu_custom_call.1} parent=35 // pred_fallthru
                _
            $region36: #{tpu_custom_call.1} parent=31 // pred_fallthru
              _
            // Predicated region
            $region37: #{tpu_custom_call.1} parent=31 // pred_check
              _
            $region38: #{tpu_custom_call.1} parent=31 // pred_check_branch
              %175 = sbr.rel (0) target = $region40
            $region39: #{tpu_custom_call.1} parent=31 // pred_region
              loop: start=0, step=1, limit=1
              $region41: #{tpu_custom_call.1} parent=39 // loop_pre_header
                _
              $region42: #{tpu_custom_call.1} parent=39 // loop_header
                %s178 = sphi 0, %s182
                %p179 = scmp.ge.s32.totalorder %s178, 1
                %s183 = sphi %s169, %s169
                %s184 = sphi %s164, %s164
              $region43: #{tpu_custom_call.1} parent=39 // loop_header_branch
                %181 = sbr.rel (%p179) target = $region47
              $region44: #{tpu_custom_call.1} parent=39 // loop_body
                %v185 = vld [vmem:[%s183] sm:$0xf]
                %186 = vst [vmem:[%s184] sm:$0xf] %v185
                %v187 = vld [vmem:[%s183 + $0x8] sm:$0xf]
                %188 = vst [vmem:[%s184 + $0x4] sm:$0xf] %v187
                %v189 = vld [vmem:[%s183 + $0x10] sm:$0xf]
                %190 = vst [vmem:[%s184 + $0x8] sm:$0xf] %v189
                %v191 = vld [vmem:[%s183 + $0x18] sm:$0xf]
                %192 = vst [vmem:[%s184 + $0xc] sm:$0xf] %v191
                %v193 = vld [vmem:[%s183 + $0x20] sm:$0xf]
                %194 = vst [vmem:[%s184 + $0x10] sm:$0xf] %v193
                %v195 = vld [vmem:[%s183 + $0x28] sm:$0xf]
                %196 = vst [vmem:[%s184 + $0x14] sm:$0xf] %v195
                %v197 = vld [vmem:[%s183 + $0x30] sm:$0xf]
                %198 = vst [vmem:[%s184 + $0x18] sm:$0xf] %v197
                %v199 = vld [vmem:[%s183 + $0x38] sm:$0xf]
                %200 = vst [vmem:[%s184 + $0x1c] sm:$0xf] %v199
                %v201 = vld [vmem:[%s183 + $0x40] sm:$0xf]
                %202 = vst [vmem:[%s184 + $0x20] sm:$0xf] %v201
                %v203 = vld [vmem:[%s183 + $0x48] sm:$0xf]
                %204 = vst [vmem:[%s184 + $0x24] sm:$0xf] %v203
                %v205 = vld [vmem:[%s183 + $0x50] sm:$0xf]
                %206 = vst [vmem:[%s184 + $0x28] sm:$0xf] %v205
                %v207 = vld [vmem:[%s183 + $0x58] sm:$0xf]
                %208 = vst [vmem:[%s184 + $0x2c] sm:$0xf] %v207
                %v209 = vld [vmem:[%s183 + $0x60] sm:$0xf]
                %210 = vst [vmem:[%s184 + $0x30] sm:$0xf] %v209
                %v211 = vld [vmem:[%s183 + $0x68] sm:$0xf]
                %212 = vst [vmem:[%s184 + $0x34] sm:$0xf] %v211
                %v213 = vld [vmem:[%s183 + $0x70] sm:$0xf]
                %214 = vst [vmem:[%s184 + $0x38] sm:$0xf] %v213
                %v215 = vld [vmem:[%s183 + $0x78] sm:$0xf]
                %216 = vst [vmem:[%s184 + $0x3c] sm:$0xf] %v215
                %v217 = vld [vmem:[%s183 + $0x80] sm:$0xf]
                %218 = vst [vmem:[%s184 + $0x40] sm:$0xf] %v217
                %v219 = vld [vmem:[%s183 + $0x88] sm:$0xf]
                %220 = vst [vmem:[%s184 + $0x44] sm:$0xf] %v219
                %v221 = vld [vmem:[%s183 + $0x90] sm:$0xf]
                %222 = vst [vmem:[%s184 + $0x48] sm:$0xf] %v221
                %v223 = vld [vmem:[%s183 + $0x98] sm:$0xf]
                %224 = vst [vmem:[%s184 + $0x4c] sm:$0xf] %v223
                %v225 = vld [vmem:[%s183 + $0xa0] sm:$0xf]
                %226 = vst [vmem:[%s184 + $0x50] sm:$0xf] %v225
                %v227 = vld [vmem:[%s183 + $0xa8] sm:$0xf]
                %228 = vst [vmem:[%s184 + $0x54] sm:$0xf] %v227
                %v229 = vld [vmem:[%s183 + $0xb0] sm:$0xf]
                %230 = vst [vmem:[%s184 + $0x58] sm:$0xf] %v229
                %v231 = vld [vmem:[%s183 + $0xb8] sm:$0xf]
                %232 = vst [vmem:[%s184 + $0x5c] sm:$0xf] %v231
                %v233 = vld [vmem:[%s183 + $0xc0] sm:$0xf]
                %234 = vst [vmem:[%s184 + $0x60] sm:$0xf] %v233
                %v235 = vld [vmem:[%s183 + $0xc8] sm:$0xf]
                %236 = vst [vmem:[%s184 + $0x64] sm:$0xf] %v235
                %v237 = vld [vmem:[%s183 + $0xd0] sm:$0xf]
                %238 = vst [vmem:[%s184 + $0x68] sm:$0xf] %v237
                %v239 = vld [vmem:[%s183 + $0xd8] sm:$0xf]
                %240 = vst [vmem:[%s184 + $0x6c] sm:$0xf] %v239
                %v241 = vld [vmem:[%s183 + $0xe0] sm:$0xf]
                %242 = vst [vmem:[%s184 + $0x70] sm:$0xf] %v241
                %v243 = vld [vmem:[%s183 + $0xe8] sm:$0xf]
                %244 = vst [vmem:[%s184 + $0x74] sm:$0xf] %v243
                %v245 = vld [vmem:[%s183 + $0xf0] sm:$0xf]
                %246 = vst [vmem:[%s184 + $0x78] sm:$0xf] %v245
                %v247 = vld [vmem:[%s183 + $0xf8] sm:$0xf]
                %248 = vst [vmem:[%s184 + $0x7c] sm:$0xf] %v247
              $region45: #{tpu_custom_call.1} parent=39 // loop_footer
                %s182 = sadd.s32 1, %s178
              $region46: #{tpu_custom_call.1} parent=39 // loop_footer_branch
                %177 = sbr.rel target = $region42
              $region47: #{tpu_custom_call.1} parent=39 // loop_exit
                _
            $region40: #{tpu_custom_call.1} parent=31 // pred_fallthru
              _
          $region32: #{tpu_custom_call.1} parent=27 // pred_fallthru
            _
          %332 = vnop
        $region28: #{tpu_custom_call.1} parent=23 // pred_fallthru
          _
      $region24: #{tpu_custom_call.1} parent=5 // pred_fallthru
        _
      %p333 = scmp.le.s32.totalorder 1, %s12
      %p334 = scmp.lt.s32.totalorder %s12, 5
      %p335 = pnand %p333, %p334
      %p336 = pneg %p335
      // Predicated region
      $region66: #{tpu_custom_call.1} parent=5 // pred_check
        _
      $region67: #{tpu_custom_call.1} parent=5 // pred_check_branch
        %338 = sbr.rel (%p335) target = $region69
      $region68: #{tpu_custom_call.1} parent=5 // pred_region
        %s339 = ssub.s32 %s12, 1
        %s340 = sand.u32 %s48, 1
        %s341 = sand.u32 %s48, 1
        %s342 = smul.addr %s341, 128
        %s343 = scalar_lea.vmem [#allocation2], %s342
        // Predicated region
        $region70: #{tpu_custom_call.1} parent=68 // pred_check
          %p344 = pneg %p61
        $region71: #{tpu_custom_call.1} parent=68 // pred_check_branch
          %346 = sbr.rel (%p344) target = $region73
        $region72: #{tpu_custom_call.1} parent=68 // pred_region
          _
        $region73: #{tpu_custom_call.1} parent=68 // pred_fallthru
          _
        %s347 = sand.u32 %s48, 1
        %s348 = sand.u32 %s48, 1
        %s349 = smul.addr %s348, 128
        %s350 = scalar_lea.vmem [#allocation2], %s349
        %p351 = pneg %p61
        %p352 = pneg %p58
        %p353 = pneg %p82
        %p354 = pneg %p79
        %p355 = pneg %p103
        %p356 = pneg %p100
        %p357 = pneg %p133
        %p358 = pneg %p130
        %s359 = sand.u32 %s120, 1
        %s360 = scalar_lea.sflag [#allocation4], %s359
        %s361 = sand.u32 %s120, 1
        %s362 = smul.addr %s361, 64
        %s363 = scalar_lea.vmem [#allocation3], %s362
        %s364 = smul.u32 4, %s24
        %v365 = vld [vmem:[%s1] sm:$0xff]
        %v366 = vld [vmem:[%s1 + $0x8] sm:$0xff]
        %v367 = vld [vmem:[%s1 + $0x10] sm:$0xff]
        %v368 = vld [vmem:[%s1 + $0x18] sm:$0xff]
        %v369 = vld [vmem:[%s1 + $0x20] sm:$0xff]
        %v370 = vld [vmem:[%s1 + $0x28] sm:$0xff]
        %v371 = vld [vmem:[%s1 + $0x30] sm:$0xff]
        %v372 = vld [vmem:[%s1 + $0x38] sm:$0xff]
        %v373 = vld [vmem:[%s1 + $0x40] sm:$0xff]
        %v374 = vld [vmem:[%s1 + $0x48] sm:$0xff]
        %v375 = vld [vmem:[%s1 + $0x50] sm:$0xff]
        %v376 = vld [vmem:[%s1 + $0x58] sm:$0xff]
        %v377 = vld [vmem:[%s1 + $0x60] sm:$0xff]
        %v378 = vld [vmem:[%s1 + $0x68] sm:$0xff]
        %v379 = vld [vmem:[%s1 + $0x70] sm:$0xff]
        %v380 = vld [vmem:[%s1 + $0x78] sm:$0xff]
        %v381 = vld [vmem:[%s2] sm:$0xf]
        %v382 = vld [vmem:[%s343] sm:$0x1]
        %v383 = vld [vmem:[%s343 + $0x4] sm:$0x1]
        %v384 = vld [vmem:[%s343 + $0x8] sm:$0x1]
        %v385 = vld [vmem:[%s343 + $0xc] sm:$0x1]
        %v386 = vld [vmem:[%s343 + $0x10] sm:$0x1]
        %v387 = vld [vmem:[%s343 + $0x14] sm:$0x1]
        %v388 = vld [vmem:[%s343 + $0x18] sm:$0x1]
        %v389 = vld [vmem:[%s343 + $0x1c] sm:$0x1]
        %v390 = vld [vmem:[%s343 + $0x20] sm:$0x1]
        %v391 = vld [vmem:[%s343 + $0x24] sm:$0x1]
        %v392 = vld [vmem:[%s343 + $0x28] sm:$0x1]
        %v393 = vld [vmem:[%s343 + $0x2c] sm:$0x1]
        %v394 = vld [vmem:[%s343 + $0x30] sm:$0x1]
        %v395 = vld [vmem:[%s343 + $0x34] sm:$0x1]
        %v396 = vld [vmem:[%s343 + $0x38] sm:$0x1]
        %v397 = vld [vmem:[%s343 + $0x3c] sm:$0x1]
        %v398 = vld [vmem:[%s343 + $0x40] sm:$0x1]
        %v399 = vld [vmem:[%s343 + $0x44] sm:$0x1]
        %v400 = vld [vmem:[%s343 + $0x48] sm:$0x1]
        %v401 = vld [vmem:[%s343 + $0x4c] sm:$0x1]
        %v402 = vld [vmem:[%s343 + $0x50] sm:$0x1]
        %v403 = vld [vmem:[%s343 + $0x54] sm:$0x1]
        %v404 = vld [vmem:[%s343 + $0x58] sm:$0x1]
        %v405 = vld [vmem:[%s343 + $0x5c] sm:$0x1]
        %v406 = vld [vmem:[%s343 + $0x60] sm:$0x1]
        %v407 = vld [vmem:[%s343 + $0x64] sm:$0x1]
        %v408 = vld [vmem:[%s343 + $0x68] sm:$0x1]
        %v409 = vld [vmem:[%s343 + $0x6c] sm:$0x1]
        %v410 = vld [vmem:[%s343 + $0x70] sm:$0x1]
        %v411 = vld [vmem:[%s343 + $0x74] sm:$0x1]
        %v412 = vld [vmem:[%s343 + $0x78] sm:$0x1]
        %v413 = vld [vmem:[%s343 + $0x7c] sm:$0x1]
        %v415 = vlaneseq
        %v416 = vshrl.u32 %v415, 7
        %v417 = vsub.s32 0, %v416
        %v418 = vrot.slane %v381, %v417
        %v419 = vlaneseq
        %v420 = vshrl.u32 %v419, 7
        %v421 = vsub.s32 1, %v420
        %v422 = vrot.slane %v381, %v421
        %v423 = vlaneseq
        %v424 = vshrl.u32 %v423, 7
        %v425 = vsub.s32 2, %v424
        %v426 = vrot.slane %v381, %v425
        %v427 = vlaneseq
        %v428 = vshrl.u32 %v427, 7
        %v429 = vsub.s32 3, %v428
        %v430 = vrot.slane %v381, %v429
        %v467 = vrot.slane %v383, 7
        %vm468 = vcmask 1041409
        %v469 = vsel %vm468, %v467, %v382
        %v470 = vrot.slane %v384, 6
        %vm471 = vcmask 1042434
        %v472 = vsel %vm471, %v470, %v469
        %v473 = vrot.slane %v385, 5
        %vm474 = vcmask 1043459
        %v475 = vsel %vm474, %v473, %v472
        %v476 = vrot.slane %v386, 4
        %vm477 = vcmask 1044484
        %v478 = vsel %vm477, %v476, %v475
        %v479 = vrot.slane %v387, 3
        %vm480 = vcmask 1045509
        %v481 = vsel %vm480, %v479, %v478
        %v482 = vrot.slane %v388, 2
        %vm483 = vcmask 1046534
        %v484 = vsel %vm483, %v482, %v481
        %v485 = vrot.slane %v389, 1
        %vm486 = vcmask 1047559
        %v487 = vsel %vm486, %v485, %v484
        %v488 = vrot.slane %v391, 7
        %v489 = vsel %vm468, %v488, %v390
        %v490 = vrot.slane %v392, 6
        %v491 = vsel %vm471, %v490, %v489
        %v492 = vrot.slane %v393, 5
        %v493 = vsel %vm474, %v492, %v491
        %v494 = vrot.slane %v394, 4
        %v495 = vsel %vm477, %v494, %v493
        %v496 = vrot.slane %v395, 3
        %v497 = vsel %vm480, %v496, %v495
        %v498 = vrot.slane %v396, 2
        %v499 = vsel %vm483, %v498, %v497
        %v500 = vrot.slane %v397, 1
        %v501 = vsel %vm486, %v500, %v499
        %v502 = vrot.slane %v399, 7
        %v503 = vsel %vm468, %v502, %v398
        %v504 = vrot.slane %v400, 6
        %v505 = vsel %vm471, %v504, %v503
        %v506 = vrot.slane %v401, 5
        %v507 = vsel %vm474, %v506, %v505
        %v508 = vrot.slane %v402, 4
        %v509 = vsel %vm477, %v508, %v507
        %v510 = vrot.slane %v403, 3
        %v511 = vsel %vm480, %v510, %v509
        %v512 = vrot.slane %v404, 2
        %v513 = vsel %vm483, %v512, %v511
        %v514 = vrot.slane %v405, 1
        %v515 = vsel %vm486, %v514, %v513
        %v516 = vrot.slane %v407, 7
        %v517 = vsel %vm468, %v516, %v406
        %v518 = vrot.slane %v408, 6
        %v519 = vsel %vm471, %v518, %v517
        %v520 = vrot.slane %v409, 5
        %v521 = vsel %vm474, %v520, %v519
        %v522 = vrot.slane %v410, 4
        %v523 = vsel %vm477, %v522, %v521
        %v524 = vrot.slane %v411, 3
        %v525 = vsel %vm480, %v524, %v523
        %v526 = vrot.slane %v412, 2
        %v527 = vsel %vm483, %v526, %v525
        %v528 = vrot.slane %v413, 1
        %v529 = vsel %vm486, %v528, %v527
        %534 = vxpose.xlu0.b32.start [1/16] %v487, 128
        %535 = vxpose.xlu0.b32.cont [2/16] %v501, 128
        %536 = vxpose.xlu0.b32.cont [3/16] %v515, 128
        %537 = vxpose.xlu0.b32.cont [4/16] %v529, 128
        %538 = vxpose.xlu0.b32.cont [5/16] 0.0, 128
        %539 = vxpose.xlu0.b32.cont [6/16] 0.0, 128
        %540 = vxpose.xlu0.b32.cont [7/16] 0.0, 128
        %541 = vxpose.xlu0.b32.cont [8/16] 0.0, 128
        %542 = vxpose.xlu0.b32.cont [9/16] 0.0, 128
        %543 = vxpose.xlu0.b32.cont [10/16] 0.0, 128
        %544 = vxpose.xlu0.b32.cont [11/16] 0.0, 128
        %545 = vxpose.xlu0.b32.cont [12/16] 0.0, 128
        %546 = vxpose.xlu0.b32.cont [13/16] 0.0, 128
        %547 = vxpose.xlu0.b32.cont [14/16] 0.0, 128
        %548 = vxpose.xlu0.b32.cont [15/16] 0.0, 128
        %549 = vxpose.xlu0.b32.end [16/16] 0.0, 128
        %v550 = vpop.trf.xlu0
        %v551 = vpop.trf.xlu0
        %v552 = vpop.trf.xlu0
        %v553 = vpop.trf.xlu0
        %v554 = vpop.trf.xlu0
        %v555 = vpop.trf.xlu0
        %v556 = vpop.trf.xlu0
        %v557 = vpop.trf.xlu0
        %v558 = vpop.trf.xlu0
        %v559 = vpop.trf.xlu0
        %v560 = vpop.trf.xlu0
        %v561 = vpop.trf.xlu0
        %v562 = vpop.trf.xlu0
        %v563 = vpop.trf.xlu0
        %v564 = vpop.trf.xlu0
        %v565 = vpop.trf.xlu0
        %vm566 = vcmask 261120
        %v568 = vsel %vm566, %v550, 0
        %570 = vmatprep.subr.mxu0 %v366
        %571 = vmatpush1.msra.mxu0 %v365
        %572 = vmatprep.subr.mxu0 %v370
        %573 = vmatpush1.msra.mxu0 %v369
        %574 = vmatprep.subr.mxu0 %v374
        %575 = vmatpush1.msra.mxu0 %v373
        %576 = vmatprep.subr.mxu0 %v378
        %577 = vmatpush1.msra.mxu0 %v377
        %578 = vmatprep.subr.mxu0 0.0
        %579 = vmatpush1.msra.mxu0 0.0
        %580 = vmatprep.subr.mxu0 0.0
        %581 = vmatpush1.msra.mxu0 0.0
        %582 = vmatprep.subr.mxu0 0.0
        %583 = vmatpush1.msra.mxu0 0.0
        %584 = vmatprep.subr.mxu0 0.0
        %585 = vmatpush1.msra.mxu0 0.0
        %586 = vmatprep.subr.mxu0 0.0
        %587 = vmatpush1.msra.mxu0 0.0
        %588 = vmatprep.subr.mxu0 0.0
        %589 = vmatpush1.msra.mxu0 0.0
        %590 = vmatprep.subr.mxu0 0.0
        %591 = vmatpush1.msra.mxu0 0.0
        %592 = vmatprep.subr.mxu0 0.0
        %593 = vmatpush1.msra.mxu0 0.0
        %594 = vmatprep.subr.mxu0 0.0
        %595 = vmatpush1.msra.mxu0 0.0
        %596 = vmatprep.subr.mxu0 0.0
        %597 = vmatpush1.msra.mxu0 0.0
        %598 = vmatprep.subr.mxu0 0.0
        %599 = vmatpush1.msra.mxu0 0.0
        %600 = vmatprep.subr.mxu0 0.0
        %601 = vmatpush1.msra.mxu0 0.0
        %602 = vmatprep.subr.mxu0 0.0
        %603 = vmatpush1.msra.mxu0 0.0
        %604 = vmatprep.subr.mxu0 0.0
        %605 = vmatpush1.msra.mxu0 0.0
        %606 = vmatprep.subr.mxu0 0.0
        %607 = vmatpush1.msra.mxu0 0.0
        %608 = vmatprep.subr.mxu0 0.0
        %609 = vmatpush1.msra.mxu0 0.0
        %610 = vmatprep.subr.mxu0 0.0
        %611 = vmatpush1.msra.mxu0 0.0
        %612 = vmatprep.subr.mxu0 0.0
        %613 = vmatpush1.msra.mxu0 0.0
        %614 = vmatprep.subr.mxu0 0.0
        %615 = vmatpush1.msra.mxu0 0.0
        %616 = vmatprep.subr.mxu0 0.0
        %617 = vmatpush1.msra.mxu0 0.0
        %618 = vmatprep.subr.mxu0 0.0
        %619 = vmatpush1.msra.mxu0 0.0
        %620 = vmatprep.subr.mxu0 0.0
        %621 = vmatpush1.msra.mxu0 0.0
        %622 = vmatprep.subr.mxu0 0.0
        %623 = vmatpush1.msra.mxu0 0.0
        %624 = vmatprep.subr.mxu0 0.0
        %625 = vmatpush1.msra.mxu0 0.0
        %626 = vmatprep.subr.mxu0 0.0
        %627 = vmatpush1.msra.mxu0 0.0
        %628 = vmatprep.subr.mxu0 0.0
        %629 = vmatpush1.msra.mxu0 0.0
        %630 = vmatprep.subr.mxu0 0.0
        %631 = vmatpush1.msra.mxu0 0.0
        %632 = vmatprep.subr.mxu0 0.0
        %633 = vmatpush1.msra.mxu0 0.0
        %634 = vmatprep.mubr.f32.mxu0 0.0
        %635 = vmatmul.mubr.f32.gmra.mrb[0].mxu0 %v568
        %v636 = vpop.f32.mrb[0].mxu0
        %v637 = vadd.f32 %v418, %v636
        %v638 = vpop.f32.mrb[0].mxu0
        %v639 = vadd.f32 %v422, %v638
        %640 = vdwg.mxu0
        %641 = vmatprep.subr.mxu0 %v368
        %642 = vmatpush1.msra.mxu0 %v367
        %643 = vmatprep.subr.mxu0 %v372
        %644 = vmatpush1.msra.mxu0 %v371
        %645 = vmatprep.subr.mxu0 %v376
        %646 = vmatpush1.msra.mxu0 %v375
        %647 = vmatprep.subr.mxu0 %v380
        %648 = vmatpush1.msra.mxu0 %v379
        %649 = vmatprep.subr.mxu0 0.0
        %650 = vmatpush1.msra.mxu0 0.0
        %651 = vmatprep.subr.mxu0 0.0
        %652 = vmatpush1.msra.mxu0 0.0
        %653 = vmatprep.subr.mxu0 0.0
        %654 = vmatpush1.msra.mxu0 0.0
        %655 = vmatprep.subr.mxu0 0.0
        %656 = vmatpush1.msra.mxu0 0.0
        %657 = vmatprep.subr.mxu0 0.0
        %658 = vmatpush1.msra.mxu0 0.0
        %659 = vmatprep.subr.mxu0 0.0
        %660 = vmatpush1.msra.mxu0 0.0
        %661 = vmatprep.subr.mxu0 0.0
        %662 = vmatpush1.msra.mxu0 0.0
        %663 = vmatprep.subr.mxu0 0.0
        %664 = vmatpush1.msra.mxu0 0.0
        %665 = vmatprep.subr.mxu0 0.0
        %666 = vmatpush1.msra.mxu0 0.0
        %667 = vmatprep.subr.mxu0 0.0
        %668 = vmatpush1.msra.mxu0 0.0
        %669 = vmatprep.subr.mxu0 0.0
        %670 = vmatpush1.msra.mxu0 0.0
        %671 = vmatprep.subr.mxu0 0.0
        %672 = vmatpush1.msra.mxu0 0.0
        %673 = vmatprep.subr.mxu0 0.0
        %674 = vmatpush1.msra.mxu0 0.0
        %675 = vmatprep.subr.mxu0 0.0
        %676 = vmatpush1.msra.mxu0 0.0
        %677 = vmatprep.subr.mxu0 0.0
        %678 = vmatpush1.msra.mxu0 0.0
        %679 = vmatprep.subr.mxu0 0.0
        %680 = vmatpush1.msra.mxu0 0.0
        %681 = vmatprep.subr.mxu0 0.0
        %682 = vmatpush1.msra.mxu0 0.0
        %683 = vmatprep.subr.mxu0 0.0
        %684 = vmatpush1.msra.mxu0 0.0
        %685 = vmatprep.subr.mxu0 0.0
        %686 = vmatpush1.msra.mxu0 0.0
        %687 = vmatprep.subr.mxu0 0.0
        %688 = vmatpush1.msra.mxu0 0.0
        %689 = vmatprep.subr.mxu0 0.0
        %690 = vmatpush1.msra.mxu0 0.0
        %691 = vmatprep.subr.mxu0 0.0
        %692 = vmatpush1.msra.mxu0 0.0
        %693 = vmatprep.subr.mxu0 0.0
        %694 = vmatpush1.msra.mxu0 0.0
        %695 = vmatprep.subr.mxu0 0.0
        %696 = vmatpush1.msra.mxu0 0.0
        %697 = vmatprep.subr.mxu0 0.0
        %698 = vmatpush1.msra.mxu0 0.0
        %699 = vmatprep.subr.mxu0 0.0
        %700 = vmatpush1.msra.mxu0 0.0
        %701 = vmatprep.subr.mxu0 0.0
        %702 = vmatpush1.msra.mxu0 0.0
        %703 = vmatprep.subr.mxu0 0.0
        %704 = vmatpush1.msra.mxu0 0.0
        %705 = vmatprep.mubr.f32.mxu0 0.0
        %706 = vmatmul.mubr.f32.gmra.mrb[0].mxu0 %v568
        %v707 = vpop.f32.mrb[0].mxu0
        %v708 = vadd.f32 %v426, %v707
        %v709 = vpop.f32.mrb[0].mxu0
        %v710 = vadd.f32 %v430, %v709
        %711 = vdwg.mxu0
        %v716 = vcombine.low %v637, %v639
        %v717 = vcombine.low %v708, %v710
        %v719 = vunpack.c.l.s4 1983009808
        %v720 = vunpack.c.0.s8 %v719
        %v721 = vlaneseq
        %v722 = vshrl.u32 %v721, 7
        %v723 = vsub.s32 %v720, %v722
        %v724 = vrot.slane %v716, %v723
        %v726 = vunpack.c.l.s4 1983009808
        %v727 = vunpack.c.0.s8 %v726
        %v728 = vlaneseq
        %v729 = vshrl.u32 %v728, 7
        %v730 = vsub.s32 %v727, %v729
        %v731 = vrot.slane %v717, %v730
        %v732 = vcombine.low %v724, %v731
        %v733 = vcombine.high %v724, %v731
        %v737 = vunpack.c.l.s4 1966171168
        %v738 = vunpack.c.0.s8 %v737
        %v739 = vlaneseq
        %v740 = vshrl.u32 %v739, 7
        %v741 = vsub.s32 %v738, %v740
        %v742 = vrot.slane %v732, %v741
        %v744 = vunpack.c.l.s4 1966171168
        %v745 = vunpack.c.0.s8 %v744
        %v746 = vlaneseq
        %v747 = vshrl.u32 %v746, 7
        %v748 = vsub.s32 %v745, %v747
        %v749 = vrot.slane %v733, %v748
        %750 = vxpose.xlu0.b32.start [1/16] %v742, 128
        %751 = vxpose.xlu0.b32.cont [2/16] %v749, 128
        %752 = vxpose.xlu0.b32.cont [3/16] 0.0, 128
        %753 = vxpose.xlu0.b32.cont [4/16] 0.0, 128
        %754 = vxpose.xlu0.b32.cont [5/16] 0.0, 128
        %755 = vxpose.xlu0.b32.cont [6/16] 0.0, 128
        %756 = vxpose.xlu0.b32.cont [7/16] 0.0, 128
        %757 = vxpose.xlu0.b32.cont [8/16] 0.0, 128
        %758 = vxpose.xlu0.b32.cont [9/16] 0.0, 128
        %759 = vxpose.xlu0.b32.cont [10/16] 0.0, 128
        %760 = vxpose.xlu0.b32.cont [11/16] 0.0, 128
        %761 = vxpose.xlu0.b32.cont [12/16] 0.0, 128
        %762 = vxpose.xlu0.b32.cont [13/16] 0.0, 128
        %763 = vxpose.xlu0.b32.cont [14/16] 0.0, 128
        %764 = vxpose.xlu0.b32.cont [15/16] 0.0, 128
        %765 = vxpose.xlu0.b32.end [16/16] 0.0, 128
        %v766 = vpop.trf.xlu0
        %v767 = vpop.trf.xlu0
        %v768 = vpop.trf.xlu0
        %v769 = vpop.trf.xlu0
        %v770 = vpop.trf.xlu0
        %v771 = vpop.trf.xlu0
        %v772 = vpop.trf.xlu0
        %v773 = vpop.trf.xlu0
        %v774 = vpop.trf.xlu0
        %v775 = vpop.trf.xlu0
        %v776 = vpop.trf.xlu0
        %v777 = vpop.trf.xlu0
        %v778 = vpop.trf.xlu0
        %v779 = vpop.trf.xlu0
        %v780 = vpop.trf.xlu0
        %v781 = vpop.trf.xlu0
        %vm782 = vcmask 125952
        %783 = vst.msk [vmem:[%s363] sm:$0xf] %vm782, %v766
        %s784 = scalar_lea.vmem %s363, 16 [#allocation3]
        %vm785 = vcmask 130052
        %786 = vst.msk [vmem:[%s784 - $0x4] sm:$0xf0] %vm785, %v766
        %s787 = scalar_lea.vmem %s363, 32 [#allocation3]
        %788 = vst.msk [vmem:[%s787] sm:$0xf] %vm782, %v767
        %s789 = scalar_lea.vmem %s363, 48 [#allocation3]
        %790 = vst.msk [vmem:[%s789 - $0x4] sm:$0xf0] %vm785, %v767
        %v791 = vld [vmem:[%s343 + $0x1] sm:$0x1]
        %v792 = vld [vmem:[%s343 + $0x5] sm:$0x1]
        %v793 = vld [vmem:[%s343 + $0x9] sm:$0x1]
        %v794 = vld [vmem:[%s343 + $0xd] sm:$0x1]
        %v795 = vld [vmem:[%s343 + $0x11] sm:$0x1]
        %v796 = vld [vmem:[%s343 + $0x15] sm:$0x1]
        %v797 = vld [vmem:[%s343 + $0x19] sm:$0x1]
        %v798 = vld [vmem:[%s343 + $0x1d] sm:$0x1]
        %v799 = vld [vmem:[%s343 + $0x21] sm:$0x1]
        %v800 = vld [vmem:[%s343 + $0x25] sm:$0x1]
        %v801 = vld [vmem:[%s343 + $0x29] sm:$0x1]
        %v802 = vld [vmem:[%s343 + $0x2d] sm:$0x1]
        %v803 = vld [vmem:[%s343 + $0x31] sm:$0x1]
        %v804 = vld [vmem:[%s343 + $0x35] sm:$0x1]
        %v805 = vld [vmem:[%s343 + $0x39] sm:$0x1]
        %v806 = vld [vmem:[%s343 + $0x3d] sm:$0x1]
        %v807 = vld [vmem:[%s343 + $0x41] sm:$0x1]
        %v808 = vld [vmem:[%s343 + $0x45] sm:$0x1]
        %v809 = vld [vmem:[%s343 + $0x49] sm:$0x1]
        %v810 = vld [vmem:[%s343 + $0x4d] sm:$0x1]
        %v811 = vld [vmem:[%s343 + $0x51] sm:$0x1]
        %v812 = vld [vmem:[%s343 + $0x55] sm:$0x1]
        %v813 = vld [vmem:[%s343 + $0x59] sm:$0x1]
        %v814 = vld [vmem:[%s343 + $0x5d] sm:$0x1]
        %v815 = vld [vmem:[%s343 + $0x61] sm:$0x1]
        %v816 = vld [vmem:[%s343 + $0x65] sm:$0x1]
        %v817 = vld [vmem:[%s343 + $0x69] sm:$0x1]
        %v818 = vld [vmem:[%s343 + $0x6d] sm:$0x1]
        %v819 = vld [vmem:[%s343 + $0x71] sm:$0x1]
        %v820 = vld [vmem:[%s343 + $0x75] sm:$0x1]
        %v821 = vld [vmem:[%s343 + $0x79] sm:$0x1]
        %v822 = vld [vmem:[%s343 + $0x7d] sm:$0x1]
        %v855 = vrot.slane %v792, 7
        %v856 = vsel %vm468, %v855, %v791
        %v857 = vrot.slane %v793, 6
        %v858 = vsel %vm471, %v857, %v856
        %v859 = vrot.slane %v794, 5
        %v860 = vsel %vm474, %v859, %v858
        %v861 = vrot.slane %v795, 4
        %v862 = vsel %vm477, %v861, %v860
        %v863 = vrot.slane %v796, 3
        %v864 = vsel %vm480, %v863, %v862
        %v865 = vrot.slane %v797, 2
        %v866 = vsel %vm483, %v865, %v864
        %v867 = vrot.slane %v798, 1
        %v868 = vsel %vm486, %v867, %v866
        %v869 = vrot.slane %v800, 7
        %v870 = vsel %vm468, %v869, %v799
        %v871 = vrot.slane %v801, 6
        %v872 = vsel %vm471, %v871, %v870
        %v873 = vrot.slane %v802, 5
        %v874 = vsel %vm474, %v873, %v872
        %v875 = vrot.slane %v803, 4
        %v876 = vsel %vm477, %v875, %v874
        %v877 = vrot.slane %v804, 3
        %v878 = vsel %vm480, %v877, %v876
        %v879 = vrot.slane %v805, 2
        %v880 = vsel %vm483, %v879, %v878
        %v881 = vrot.slane %v806, 1
        %v882 = vsel %vm486, %v881, %v880
        %v883 = vrot.slane %v808, 7
        %v884 = vsel %vm468, %v883, %v807
        %v885 = vrot.slane %v809, 6
        %v886 = vsel %vm471, %v885, %v884
        %v887 = vrot.slane %v810, 5
        %v888 = vsel %vm474, %v887, %v886
        %v889 = vrot.slane %v811, 4
        %v890 = vsel %vm477, %v889, %v888
        %v891 = vrot.slane %v812, 3
        %v892 = vsel %vm480, %v891, %v890
        %v893 = vrot.slane %v813, 2
        %v894 = vsel %vm483, %v893, %v892
        %v895 = vrot.slane %v814, 1
        %v896 = vsel %vm486, %v895, %v894
        %v897 = vrot.slane %v816, 7
        %v898 = vsel %vm468, %v897, %v815
        %v899 = vrot.slane %v817, 6
        %v900 = vsel %vm471, %v899, %v898
        %v901 = vrot.slane %v818, 5
        %v902 = vsel %vm474, %v901, %v900
        %v903 = vrot.slane %v819, 4
        %v904 = vsel %vm477, %v903, %v902
        %v905 = vrot.slane %v820, 3
        %v906 = vsel %vm480, %v905, %v904
        %v907 = vrot.slane %v821, 2
        %v908 = vsel %vm483, %v907, %v906
        %v909 = vrot.slane %v822, 1
        %v910 = vsel %vm486, %v909, %v908
        %915 = vxpose.xlu0.b32.start [1/16] %v868, 128
        %916 = vxpose.xlu0.b32.cont [2/16] %v882, 128
        %917 = vxpose.xlu0.b32.cont [3/16] %v896, 128
        %918 = vxpose.xlu0.b32.cont [4/16] %v910, 128
        %919 = vxpose.xlu0.b32.cont [5/16] 0.0, 128
        %920 = vxpose.xlu0.b32.cont [6/16] 0.0, 128
        %921 = vxpose.xlu0.b32.cont [7/16] 0.0, 128
        %922 = vxpose.xlu0.b32.cont [8/16] 0.0, 128
        %923 = vxpose.xlu0.b32.cont [9/16] 0.0, 128
        %924 = vxpose.xlu0.b32.cont [10/16] 0.0, 128
        %925 = vxpose.xlu0.b32.cont [11/16] 0.0, 128
        %926 = vxpose.xlu0.b32.cont [12/16] 0.0, 128
        %927 = vxpose.xlu0.b32.cont [13/16] 0.0, 128
        %928 = vxpose.xlu0.b32.cont [14/16] 0.0, 128
        %929 = vxpose.xlu0.b32.cont [15/16] 0.0, 128
        %930 = vxpose.xlu0.b32.end [16/16] 0.0, 128
        %v931 = vpop.trf.xlu0
        %v932 = vpop.trf.xlu0
        %v933 = vpop.trf.xlu0
        %v934 = vpop.trf.xlu0
        %v935 = vpop.trf.xlu0
        %v936 = vpop.trf.xlu0
        %v937 = vpop.trf.xlu0
        %v938 = vpop.trf.xlu0
        %v939 = vpop.trf.xlu0
        %v940 = vpop.trf.xlu0
        %v941 = vpop.trf.xlu0
        %v942 = vpop.trf.xlu0
        %v943 = vpop.trf.xlu0
        %v944 = vpop.trf.xlu0
        %v945 = vpop.trf.xlu0
        %v946 = vpop.trf.xlu0
        %v948 = vsel %vm566, %v931, 0
        %950 = vmatprep.subr.mxu0 %v366
        %951 = vmatpush1.msra.mxu0 %v365
        %952 = vmatprep.subr.mxu0 %v370
        %953 = vmatpush1.msra.mxu0 %v369
        %954 = vmatprep.subr.mxu0 %v374
        %955 = vmatpush1.msra.mxu0 %v373
        %956 = vmatprep.subr.mxu0 %v378
        %957 = vmatpush1.msra.mxu0 %v377
        %958 = vmatprep.subr.mxu0 0.0
        %959 = vmatpush1.msra.mxu0 0.0
        %960 = vmatprep.subr.mxu0 0.0
        %961 = vmatpush1.msra.mxu0 0.0
        %962 = vmatprep.subr.mxu0 0.0
        %963 = vmatpush1.msra.mxu0 0.0
        %964 = vmatprep.subr.mxu0 0.0
        %965 = vmatpush1.msra.mxu0 0.0
        %966 = vmatprep.subr.mxu0 0.0
        %967 = vmatpush1.msra.mxu0 0.0
        %968 = vmatprep.subr.mxu0 0.0
        %969 = vmatpush1.msra.mxu0 0.0
        %970 = vmatprep.subr.mxu0 0.0
        %971 = vmatpush1.msra.mxu0 0.0
        %972 = vmatprep.subr.mxu0 0.0
        %973 = vmatpush1.msra.mxu0 0.0
        %974 = vmatprep.subr.mxu0 0.0
        %975 = vmatpush1.msra.mxu0 0.0
        %976 = vmatprep.subr.mxu0 0.0
        %977 = vmatpush1.msra.mxu0 0.0
        %978 = vmatprep.subr.mxu0 0.0
        %979 = vmatpush1.msra.mxu0 0.0
        %980 = vmatprep.subr.mxu0 0.0
        %981 = vmatpush1.msra.mxu0 0.0
        %982 = vmatprep.subr.mxu0 0.0
        %983 = vmatpush1.msra.mxu0 0.0
        %984 = vmatprep.subr.mxu0 0.0
        %985 = vmatpush1.msra.mxu0 0.0
        %986 = vmatprep.subr.mxu0 0.0
        %987 = vmatpush1.msra.mxu0 0.0
        %988 = vmatprep.subr.mxu0 0.0
        %989 = vmatpush1.msra.mxu0 0.0
        %990 = vmatprep.subr.mxu0 0.0
        %991 = vmatpush1.msra.mxu0 0.0
        %992 = vmatprep.subr.mxu0 0.0
        %993 = vmatpush1.msra.mxu0 0.0
        %994 = vmatprep.subr.mxu0 0.0
        %995 = vmatpush1.msra.mxu0 0.0
        %996 = vmatprep.subr.mxu0 0.0
        %997 = vmatpush1.msra.mxu0 0.0
        %998 = vmatprep.subr.mxu0 0.0
        %999 = vmatpush1.msra.mxu0 0.0
        %1000 = vmatprep.subr.mxu0 0.0
        %1001 = vmatpush1.msra.mxu0 0.0
        %1002 = vmatprep.subr.mxu0 0.0
        %1003 = vmatpush1.msra.mxu0 0.0
        %1004 = vmatprep.subr.mxu0 0.0
        %1005 = vmatpush1.msra.mxu0 0.0
        %1006 = vmatprep.subr.mxu0 0.0
        %1007 = vmatpush1.msra.mxu0 0.0
        %1008 = vmatprep.subr.mxu0 0.0
        %1009 = vmatpush1.msra.mxu0 0.0
        %1010 = vmatprep.subr.mxu0 0.0
        %1011 = vmatpush1.msra.mxu0 0.0
        %1012 = vmatprep.subr.mxu0 0.0
        %1013 = vmatpush1.msra.mxu0 0.0
        %1014 = vmatprep.mubr.f32.mxu0 0.0
        %1015 = vmatmul.mubr.f32.gmra.mrb[0].mxu0 %v948
        %v1016 = vpop.f32.mrb[0].mxu0
        %v1017 = vadd.f32 %v418, %v1016
        %v1018 = vpop.f32.mrb[0].mxu0
        %v1019 = vadd.f32 %v422, %v1018
        %1020 = vdwg.mxu0
        %1021 = vmatprep.subr.mxu0 %v368
        %1022 = vmatpush1.msra.mxu0 %v367
        %1023 = vmatprep.subr.mxu0 %v372
        %1024 = vmatpush1.msra.mxu0 %v371
        %1025 = vmatprep.subr.mxu0 %v376
        %1026 = vmatpush1.msra.mxu0 %v375
        %1027 = vmatprep.subr.mxu0 %v380
        %1028 = vmatpush1.msra.mxu0 %v379
        %1029 = vmatprep.subr.mxu0 0.0
        %1030 = vmatpush1.msra.mxu0 0.0
        %1031 = vmatprep.subr.mxu0 0.0
        %1032 = vmatpush1.msra.mxu0 0.0
        %1033 = vmatprep.subr.mxu0 0.0
        %1034 = vmatpush1.msra.mxu0 0.0
        %1035 = vmatprep.subr.mxu0 0.0
        %1036 = vmatpush1.msra.mxu0 0.0
        %1037 = vmatprep.subr.mxu0 0.0
        %1038 = vmatpush1.msra.mxu0 0.0
        %1039 = vmatprep.subr.mxu0 0.0
        %1040 = vmatpush1.msra.mxu0 0.0
        %1041 = vmatprep.subr.mxu0 0.0
        %1042 = vmatpush1.msra.mxu0 0.0
        %1043 = vmatprep.subr.mxu0 0.0
        %1044 = vmatpush1.msra.mxu0 0.0
        %1045 = vmatprep.subr.mxu0 0.0
        %1046 = vmatpush1.msra.mxu0 0.0
        %1047 = vmatprep.subr.mxu0 0.0
        %1048 = vmatpush1.msra.mxu0 0.0
        %1049 = vmatprep.subr.mxu0 0.0
        %1050 = vmatpush1.msra.mxu0 0.0
        %1051 = vmatprep.subr.mxu0 0.0
        %1052 = vmatpush1.msra.mxu0 0.0
        %1053 = vmatprep.subr.mxu0 0.0
        %1054 = vmatpush1.msra.mxu0 0.0
        %1055 = vmatprep.subr.mxu0 0.0
        %1056 = vmatpush1.msra.mxu0 0.0
        %1057 = vmatprep.subr.mxu0 0.0
        %1058 = vmatpush1.msra.mxu0 0.0
        %1059 = vmatprep.subr.mxu0 0.0
        %1060 = vmatpush1.msra.mxu0 0.0
        %1061 = vmatprep.subr.mxu0 0.0
        %1062 = vmatpush1.msra.mxu0 0.0
        %1063 = vmatprep.subr.mxu0 0.0
        %1064 = vmatpush1.msra.mxu0 0.0
        %1065 = vmatprep.subr.mxu0 0.0
        %1066 = vmatpush1.msra.mxu0 0.0
        %1067 = vmatprep.subr.mxu0 0.0
        %1068 = vmatpush1.msra.mxu0 0.0
        %1069 = vmatprep.subr.mxu0 0.0
        %1070 = vmatpush1.msra.mxu0 0.0
        %1071 = vmatprep.subr.mxu0 0.0
        %1072 = vmatpush1.msra.mxu0 0.0
        %1073 = vmatprep.subr.mxu0 0.0
        %1074 = vmatpush1.msra.mxu0 0.0
        %1075 = vmatprep.subr.mxu0 0.0
        %1076 = vmatpush1.msra.mxu0 0.0
        %1077 = vmatprep.subr.mxu0 0.0
        %1078 = vmatpush1.msra.mxu0 0.0
        %1079 = vmatprep.subr.mxu0 0.0
        %1080 = vmatpush1.msra.mxu0 0.0
        %1081 = vmatprep.subr.mxu0 0.0
        %1082 = vmatpush1.msra.mxu0 0.0
        %1083 = vmatprep.subr.mxu0 0.0
        %1084 = vmatpush1.msra.mxu0 0.0
        %1085 = vmatprep.mubr.f32.mxu0 0.0
        %1086 = vmatmul.mubr.f32.gmra.mrb[0].mxu0 %v948
        %v1087 = vpop.f32.mrb[0].mxu0
        %v1088 = vadd.f32 %v426, %v1087
        %v1089 = vpop.f32.mrb[0].mxu0
        %v1090 = vadd.f32 %v430, %v1089
        %1091 = vdwg.mxu0
        %v1096 = vcombine.low %v1017, %v1019
        %v1097 = vcombine.low %v1088, %v1090
        %v1099 = vunpack.c.l.s4 1983009808
        %v1100 = vunpack.c.0.s8 %v1099
        %v1101 = vlaneseq
        %v1102 = vshrl.u32 %v1101, 7
        %v1103 = vsub.s32 %v1100, %v1102
        %v1104 = vrot.slane %v1096, %v1103
        %v1106 = vunpack.c.l.s4 1983009808
        %v1107 = vunpack.c.0.s8 %v1106
        %v1108 = vlaneseq
        %v1109 = vshrl.u32 %v1108, 7
        %v1110 = vsub.s32 %v1107, %v1109
        %v1111 = vrot.slane %v1097, %v1110
        %v1112 = vcombine.low %v1104, %v1111
        %v1113 = vcombine.high %v1104, %v1111
        %v1117 = vunpack.c.l.s4 1966171168
        %v1118 = vunpack.c.0.s8 %v1117
        %v1119 = vlaneseq
        %v1120 = vshrl.u32 %v1119, 7
        %v1121 = vsub.s32 %v1118, %v1120
        %v1122 = vrot.slane %v1112, %v1121
        %v1124 = vunpack.c.l.s4 1966171168
        %v1125 = vunpack.c.0.s8 %v1124
        %v1126 = vlaneseq
        %v1127 = vshrl.u32 %v1126, 7
        %v1128 = vsub.s32 %v1125, %v1127
        %v1129 = vrot.slane %v1113, %v1128
        %1130 = vxpose.xlu0.b32.start [1/16] %v1122, 128
        %1131 = vxpose.xlu0.b32.cont [2/16] %v1129, 128
        %1132 = vxpose.xlu0.b32.cont [3/16] 0.0, 128
        %1133 = vxpose.xlu0.b32.cont [4/16] 0.0, 128
        %1134 = vxpose.xlu0.b32.cont [5/16] 0.0, 128
        %1135 = vxpose.xlu0.b32.cont [6/16] 0.0, 128
        %1136 = vxpose.xlu0.b32.cont [7/16] 0.0, 128
        %1137 = vxpose.xlu0.b32.cont [8/16] 0.0, 128
        %1138 = vxpose.xlu0.b32.cont [9/16] 0.0, 128
        %1139 = vxpose.xlu0.b32.cont [10/16] 0.0, 128
        %1140 = vxpose.xlu0.b32.cont [11/16] 0.0, 128
        %1141 = vxpose.xlu0.b32.cont [12/16] 0.0, 128
        %1142 = vxpose.xlu0.b32.cont [13/16] 0.0, 128
        %1143 = vxpose.xlu0.b32.cont [14/16] 0.0, 128
        %1144 = vxpose.xlu0.b32.cont [15/16] 0.0, 128
        %1145 = vxpose.xlu0.b32.end [16/16] 0.0, 128
        %v1146 = vpop.trf.xlu0
        %v1147 = vpop.trf.xlu0
        %v1148 = vpop.trf.xlu0
        %v1149 = vpop.trf.xlu0
        %v1150 = vpop.trf.xlu0
        %v1151 = vpop.trf.xlu0
        %v1152 = vpop.trf.xlu0
        %v1153 = vpop.trf.xlu0
        %v1154 = vpop.trf.xlu0
        %v1155 = vpop.trf.xlu0
        %v1156 = vpop.trf.xlu0
        %v1157 = vpop.trf.xlu0
        %v1158 = vpop.trf.xlu0
        %v1159 = vpop.trf.xlu0
        %v1160 = vpop.trf.xlu0
        %v1161 = vpop.trf.xlu0
        %s1162 = scalar_lea.vmem %s363, 4 [#allocation3]
        %1163 = vst.msk [vmem:[%s1162] sm:$0xf] %vm782, %v1146
        %s1164 = scalar_lea.vmem %s363, 20 [#allocation3]
        %1165 = vst.msk [vmem:[%s1164 - $0x4] sm:$0xf0] %vm785, %v1146
        %s1166 = scalar_lea.vmem %s363, 36 [#allocation3]
        %1167 = vst.msk [vmem:[%s1166] sm:$0xf] %vm782, %v1147
        %s1168 = scalar_lea.vmem %s363, 52 [#allocation3]
        %1169 = vst.msk [vmem:[%s1168 - $0x4] sm:$0xf0] %vm785, %v1147
        %v1170 = vld [vmem:[%s343 + $0x2] sm:$0x1]
        %v1171 = vld [vmem:[%s343 + $0x6] sm:$0x1]
        %v1172 = vld [vmem:[%s343 + $0xa] sm:$0x1]
        %v1173 = vld [vmem:[%s343 + $0xe] sm:$0x1]
        %v1174 = vld [vmem:[%s343 + $0x12] sm:$0x1]
        %v1175 = vld [vmem:[%s343 + $0x16] sm:$0x1]
        %v1176 = vld [vmem:[%s343 + $0x1a] sm:$0x1]
        %v1177 = vld [vmem:[%s343 + $0x1e] sm:$0x1]
        %v1178 = vld [vmem:[%s343 + $0x22] sm:$0x1]
        %v1179 = vld [vmem:[%s343 + $0x26] sm:$0x1]
        %v1180 = vld [vmem:[%s343 + $0x2a] sm:$0x1]
        %v1181 = vld [vmem:[%s343 + $0x2e] sm:$0x1]
        %v1182 = vld [vmem:[%s343 + $0x32] sm:$0x1]
        %v1183 = vld [vmem:[%s343 + $0x36] sm:$0x1]
        %v1184 = vld [vmem:[%s343 + $0x3a] sm:$0x1]
        %v1185 = vld [vmem:[%s343 + $0x3e] sm:$0x1]
        %v1186 = vld [vmem:[%s343 + $0x42] sm:$0x1]
        %v1187 = vld [vmem:[%s343 + $0x46] sm:$0x1]
        %v1188 = vld [vmem:[%s343 + $0x4a] sm:$0x1]
        %v1189 = vld [vmem:[%s343 + $0x4e] sm:$0x1]
        %v1190 = vld [vmem:[%s343 + $0x52] sm:$0x1]
        %v1191 = vld [vmem:[%s343 + $0x56] sm:$0x1]
        %v1192 = vld [vmem:[%s343 + $0x5a] sm:$0x1]
        %v1193 = vld [vmem:[%s343 + $0x5e] sm:$0x1]
        %v1194 = vld [vmem:[%s343 + $0x62] sm:$0x1]
        %v1195 = vld [vmem:[%s343 + $0x66] sm:$0x1]
        %v1196 = vld [vmem:[%s343 + $0x6a] sm:$0x1]
        %v1197 = vld [vmem:[%s343 + $0x6e] sm:$0x1]
        %v1198 = vld [vmem:[%s343 + $0x72] sm:$0x1]
        %v1199 = vld [vmem:[%s343 + $0x76] sm:$0x1]
        %v1200 = vld [vmem:[%s343 + $0x7a] sm:$0x1]
        %v1201 = vld [vmem:[%s343 + $0x7e] sm:$0x1]
        %v1234 = vrot.slane %v1171, 7
        %v1235 = vsel %vm468, %v1234, %v1170
        %v1236 = vrot.slane %v1172, 6
        %v1237 = vsel %vm471, %v1236, %v1235
        %v1238 = vrot.slane %v1173, 5
        %v1239 = vsel %vm474, %v1238, %v1237
        %v1240 = vrot.slane %v1174, 4
        %v1241 = vsel %vm477, %v1240, %v1239
        %v1242 = vrot.slane %v1175, 3
        %v1243 = vsel %vm480, %v1242, %v1241
        %v1244 = vrot.slane %v1176, 2
        %v1245 = vsel %vm483, %v1244, %v1243
        %v1246 = vrot.slane %v1177, 1
        %v1247 = vsel %vm486, %v1246, %v1245
        %v1248 = vrot.slane %v1179, 7
        %v1249 = vsel %vm468, %v1248, %v1178
        %v1250 = vrot.slane %v1180, 6
        %v1251 = vsel %vm471, %v1250, %v1249
        %v1252 = vrot.slane %v1181, 5
        %v1253 = vsel %vm474, %v1252, %v1251
        %v1254 = vrot.slane %v1182, 4
        %v1255 = vsel %vm477, %v1254, %v1253
        %v1256 = vrot.slane %v1183, 3
        %v1257 = vsel %vm480, %v1256, %v1255
        %v1258 = vrot.slane %v1184, 2
        %v1259 = vsel %vm483, %v1258, %v1257
        %v1260 = vrot.slane %v1185, 1
        %v1261 = vsel %vm486, %v1260, %v1259
        %v1262 = vrot.slane %v1187, 7
        %v1263 = vsel %vm468, %v1262, %v1186
        %v1264 = vrot.slane %v1188, 6
        %v1265 = vsel %vm471, %v1264, %v1263
        %v1266 = vrot.slane %v1189, 5
        %v1267 = vsel %vm474, %v1266, %v1265
        %v1268 = vrot.slane %v1190, 4
        %v1269 = vsel %vm477, %v1268, %v1267
        %v1270 = vrot.slane %v1191, 3
        %v1271 = vsel %vm480, %v1270, %v1269
        %v1272 = vrot.slane %v1192, 2
        %v1273 = vsel %vm483, %v1272, %v1271
        %v1274 = vrot.slane %v1193, 1
        %v1275 = vsel %vm486, %v1274, %v1273
        %v1276 = vrot.slane %v1195, 7
        %v1277 = vsel %vm468, %v1276, %v1194
        %v1278 = vrot.slane %v1196, 6
        %v1279 = vsel %vm471, %v1278, %v1277
        %v1280 = vrot.slane %v1197, 5
        %v1281 = vsel %vm474, %v1280, %v1279
        %v1282 = vrot.slane %v1198, 4
        %v1283 = vsel %vm477, %v1282, %v1281
        %v1284 = vrot.slane %v1199, 3
        %v1285 = vsel %vm480, %v1284, %v1283
        %v1286 = vrot.slane %v1200, 2
        %v1287 = vsel %vm483, %v1286, %v1285
        %v1288 = vrot.slane %v1201, 1
        %v1289 = vsel %vm486, %v1288, %v1287
        %1294 = vxpose.xlu0.b32.start [1/16] %v1247, 128
        %1295 = vxpose.xlu0.b32.cont [2/16] %v1261, 128
        %1296 = vxpose.xlu0.b32.cont [3/16] %v1275, 128
        %1297 = vxpose.xlu0.b32.cont [4/16] %v1289, 128
        %1298 = vxpose.xlu0.b32.cont [5/16] 0.0, 128
        %1299 = vxpose.xlu0.b32.cont [6/16] 0.0, 128
        %1300 = vxpose.xlu0.b32.cont [7/16] 0.0, 128
        %1301 = vxpose.xlu0.b32.cont [8/16] 0.0, 128
        %1302 = vxpose.xlu0.b32.cont [9/16] 0.0, 128
        %1303 = vxpose.xlu0.b32.cont [10/16] 0.0, 128
        %1304 = vxpose.xlu0.b32.cont [11/16] 0.0, 128
        %1305 = vxpose.xlu0.b32.cont [12/16] 0.0, 128
        %1306 = vxpose.xlu0.b32.cont [13/16] 0.0, 128
        %1307 = vxpose.xlu0.b32.cont [14/16] 0.0, 128
        %1308 = vxpose.xlu0.b32.cont [15/16] 0.0, 128
        %1309 = vxpose.xlu0.b32.end [16/16] 0.0, 128
        %v1310 = vpop.trf.xlu0
        %v1311 = vpop.trf.xlu0
        %v1312 = vpop.trf.xlu0
        %v1313 = vpop.trf.xlu0
        %v1314 = vpop.trf.xlu0
        %v1315 = vpop.trf.xlu0
        %v1316 = vpop.trf.xlu0
        %v1317 = vpop.trf.xlu0
        %v1318 = vpop.trf.xlu0
        %v1319 = vpop.trf.xlu0
        %v1320 = vpop.trf.xlu0
        %v1321 = vpop.trf.xlu0
        %v1322 = vpop.trf.xlu0
        %v1323 = vpop.trf.xlu0
        %v1324 = vpop.trf.xlu0
        %v1325 = vpop.trf.xlu0
        %v1327 = vsel %vm566, %v1310, 0
        %1329 = vmatprep.subr.mxu0 %v366
        %1330 = vmatpush1.msra.mxu0 %v365
        %1331 = vmatprep.subr.mxu0 %v370
        %1332 = vmatpush1.msra.mxu0 %v369
        %1333 = vmatprep.subr.mxu0 %v374
        %1334 = vmatpush1.msra.mxu0 %v373
        %1335 = vmatprep.subr.mxu0 %v378
        %1336 = vmatpush1.msra.mxu0 %v377
        %1337 = vmatprep.subr.mxu0 0.0
        %1338 = vmatpush1.msra.mxu0 0.0
        %1339 = vmatprep.subr.mxu0 0.0
        %1340 = vmatpush1.msra.mxu0 0.0
        %1341 = vmatprep.subr.mxu0 0.0
        %1342 = vmatpush1.msra.mxu0 0.0
        %1343 = vmatprep.subr.mxu0 0.0
        %1344 = vmatpush1.msra.mxu0 0.0
        %1345 = vmatprep.subr.mxu0 0.0
        %1346 = vmatpush1.msra.mxu0 0.0
        %1347 = vmatprep.subr.mxu0 0.0
        %1348 = vmatpush1.msra.mxu0 0.0
        %1349 = vmatprep.subr.mxu0 0.0
        %1350 = vmatpush1.msra.mxu0 0.0
        %1351 = vmatprep.subr.mxu0 0.0
        %1352 = vmatpush1.msra.mxu0 0.0
        %1353 = vmatprep.subr.mxu0 0.0
        %1354 = vmatpush1.msra.mxu0 0.0
        %1355 = vmatprep.subr.mxu0 0.0
        %1356 = vmatpush1.msra.mxu0 0.0
        %1357 = vmatprep.subr.mxu0 0.0
        %1358 = vmatpush1.msra.mxu0 0.0
        %1359 = vmatprep.subr.mxu0 0.0
        %1360 = vmatpush1.msra.mxu0 0.0
        %1361 = vmatprep.subr.mxu0 0.0
        %1362 = vmatpush1.msra.mxu0 0.0
        %1363 = vmatprep.subr.mxu0 0.0
        %1364 = vmatpush1.msra.mxu0 0.0
        %1365 = vmatprep.subr.mxu0 0.0
        %1366 = vmatpush1.msra.mxu0 0.0
        %1367 = vmatprep.subr.mxu0 0.0
        %1368 = vmatpush1.msra.mxu0 0.0
        %1369 = vmatprep.subr.mxu0 0.0
        %1370 = vmatpush1.msra.mxu0 0.0
        %1371 = vmatprep.subr.mxu0 0.0
        %1372 = vmatpush1.msra.mxu0 0.0
        %1373 = vmatprep.subr.mxu0 0.0
        %1374 = vmatpush1.msra.mxu0 0.0
        %1375 = vmatprep.subr.mxu0 0.0
        %1376 = vmatpush1.msra.mxu0 0.0
        %1377 = vmatprep.subr.mxu0 0.0
        %1378 = vmatpush1.msra.mxu0 0.0
        %1379 = vmatprep.subr.mxu0 0.0
        %1380 = vmatpush1.msra.mxu0 0.0
        %1381 = vmatprep.subr.mxu0 0.0
        %1382 = vmatpush1.msra.mxu0 0.0
        %1383 = vmatprep.subr.mxu0 0.0
        %1384 = vmatpush1.msra.mxu0 0.0
        %1385 = vmatprep.subr.mxu0 0.0
        %1386 = vmatpush1.msra.mxu0 0.0
        %1387 = vmatprep.subr.mxu0 0.0
        %1388 = vmatpush1.msra.mxu0 0.0
        %1389 = vmatprep.subr.mxu0 0.0
        %1390 = vmatpush1.msra.mxu0 0.0
        %1391 = vmatprep.subr.mxu0 0.0
        %1392 = vmatpush1.msra.mxu0 0.0
        %1393 = vmatprep.mubr.f32.mxu0 0.0
        %1394 = vmatmul.mubr.f32.gmra.mrb[0].mxu0 %v1327
        %v1395 = vpop.f32.mrb[0].mxu0
        %v1396 = vadd.f32 %v418, %v1395
        %v1397 = vpop.f32.mrb[0].mxu0
        %v1398 = vadd.f32 %v422, %v1397
        %1399 = vdwg.mxu0
        %1400 = vmatprep.subr.mxu0 %v368
        %1401 = vmatpush1.msra.mxu0 %v367
        %1402 = vmatprep.subr.mxu0 %v372
        %1403 = vmatpush1.msra.mxu0 %v371
        %1404 = vmatprep.subr.mxu0 %v376
        %1405 = vmatpush1.msra.mxu0 %v375
        %1406 = vmatprep.subr.mxu0 %v380
        %1407 = vmatpush1.msra.mxu0 %v379
        %1408 = vmatprep.subr.mxu0 0.0
        %1409 = vmatpush1.msra.mxu0 0.0
        %1410 = vmatprep.subr.mxu0 0.0
        %1411 = vmatpush1.msra.mxu0 0.0
        %1412 = vmatprep.subr.mxu0 0.0
        %1413 = vmatpush1.msra.mxu0 0.0
        %1414 = vmatprep.subr.mxu0 0.0
        %1415 = vmatpush1.msra.mxu0 0.0
        %1416 = vmatprep.subr.mxu0 0.0
        %1417 = vmatpush1.msra.mxu0 0.0
        %1418 = vmatprep.subr.mxu0 0.0
        %1419 = vmatpush1.msra.mxu0 0.0
        %1420 = vmatprep.subr.mxu0 0.0
        %1421 = vmatpush1.msra.mxu0 0.0
        %1422 = vmatprep.subr.mxu0 0.0
        %1423 = vmatpush1.msra.mxu0 0.0
        %1424 = vmatprep.subr.mxu0 0.0
        %1425 = vmatpush1.msra.mxu0 0.0
        %1426 = vmatprep.subr.mxu0 0.0
        %1427 = vmatpush1.msra.mxu0 0.0
        %1428 = vmatprep.subr.mxu0 0.0
        %1429 = vmatpush1.msra.mxu0 0.0
        %1430 = vmatprep.subr.mxu0 0.0
        %1431 = vmatpush1.msra.mxu0 0.0
        %1432 = vmatprep.subr.mxu0 0.0
        %1433 = vmatpush1.msra.mxu0 0.0
        %1434 = vmatprep.subr.mxu0 0.0
        %1435 = vmatpush1.msra.mxu0 0.0
        %1436 = vmatprep.subr.mxu0 0.0
        %1437 = vmatpush1.msra.mxu0 0.0
        %1438 = vmatprep.subr.mxu0 0.0
        %1439 = vmatpush1.msra.mxu0 0.0
        %1440 = vmatprep.subr.mxu0 0.0
        %1441 = vmatpush1.msra.mxu0 0.0
        %1442 = vmatprep.subr.mxu0 0.0
        %1443 = vmatpush1.msra.mxu0 0.0
        %1444 = vmatprep.subr.mxu0 0.0
        %1445 = vmatpush1.msra.mxu0 0.0
        %1446 = vmatprep.subr.mxu0 0.0
        %1447 = vmatpush1.msra.mxu0 0.0
        %1448 = vmatprep.subr.mxu0 0.0
        %1449 = vmatpush1.msra.mxu0 0.0
        %1450 = vmatprep.subr.mxu0 0.0
        %1451 = vmatpush1.msra.mxu0 0.0
        %1452 = vmatprep.subr.mxu0 0.0
        %1453 = vmatpush1.msra.mxu0 0.0
        %1454 = vmatprep.subr.mxu0 0.0
        %1455 = vmatpush1.msra.mxu0 0.0
        %1456 = vmatprep.subr.mxu0 0.0
        %1457 = vmatpush1.msra.mxu0 0.0
        %1458 = vmatprep.subr.mxu0 0.0
        %1459 = vmatpush1.msra.mxu0 0.0
        %1460 = vmatprep.subr.mxu0 0.0
        %1461 = vmatpush1.msra.mxu0 0.0
        %1462 = vmatprep.subr.mxu0 0.0
        %1463 = vmatpush1.msra.mxu0 0.0
        %1464 = vmatprep.mubr.f32.mxu0 0.0
        %1465 = vmatmul.mubr.f32.gmra.mrb[0].mxu0 %v1327
        %v1466 = vpop.f32.mrb[0].mxu0
        %v1467 = vadd.f32 %v426, %v1466
        %v1468 = vpop.f32.mrb[0].mxu0
        %v1469 = vadd.f32 %v430, %v1468
        %1470 = vdwg.mxu0
        %v1475 = vcombine.low %v1396, %v1398
        %v1476 = vcombine.low %v1467, %v1469
        %v1478 = vunpack.c.l.s4 1983009808
        %v1479 = vunpack.c.0.s8 %v1478
        %v1480 = vlaneseq
        %v1481 = vshrl.u32 %v1480, 7
        %v1482 = vsub.s32 %v1479, %v1481
        %v1483 = vrot.slane %v1475, %v1482
        %v1485 = vunpack.c.l.s4 1983009808
        %v1486 = vunpack.c.0.s8 %v1485
        %v1487 = vlaneseq
        %v1488 = vshrl.u32 %v1487, 7
        %v1489 = vsub.s32 %v1486, %v1488
        %v1490 = vrot.slane %v1476, %v1489
        %v1491 = vcombine.low %v1483, %v1490
        %v1492 = vcombine.high %v1483, %v1490
        %v1496 = vunpack.c.l.s4 1966171168
        %v1497 = vunpack.c.0.s8 %v1496
        %v1498 = vlaneseq
        %v1499 = vshrl.u32 %v1498, 7
        %v1500 = vsub.s32 %v1497, %v1499
        %v1501 = vrot.slane %v1491, %v1500
        %v1503 = vunpack.c.l.s4 1966171168
        %v1504 = vunpack.c.0.s8 %v1503
        %v1505 = vlaneseq
        %v1506 = vshrl.u32 %v1505, 7
        %v1507 = vsub.s32 %v1504, %v1506
        %v1508 = vrot.slane %v1492, %v1507
        %1509 = vxpose.xlu0.b32.start [1/16] %v1501, 128
        %1510 = vxpose.xlu0.b32.cont [2/16] %v1508, 128
        %1511 = vxpose.xlu0.b32.cont [3/16] 0.0, 128
        %1512 = vxpose.xlu0.b32.cont [4/16] 0.0, 128
        %1513 = vxpose.xlu0.b32.cont [5/16] 0.0, 128
        %1514 = vxpose.xlu0.b32.cont [6/16] 0.0, 128
        %1515 = vxpose.xlu0.b32.cont [7/16] 0.0, 128
        %1516 = vxpose.xlu0.b32.cont [8/16] 0.0, 128
        %1517 = vxpose.xlu0.b32.cont [9/16] 0.0, 128
        %1518 = vxpose.xlu0.b32.cont [10/16] 0.0, 128
        %1519 = vxpose.xlu0.b32.cont [11/16] 0.0, 128
        %1520 = vxpose.xlu0.b32.cont [12/16] 0.0, 128
        %1521 = vxpose.xlu0.b32.cont [13/16] 0.0, 128
        %1522 = vxpose.xlu0.b32.cont [14/16] 0.0, 128
        %1523 = vxpose.xlu0.b32.cont [15/16] 0.0, 128
        %1524 = vxpose.xlu0.b32.end [16/16] 0.0, 128
        %v1525 = vpop.trf.xlu0
        %v1526 = vpop.trf.xlu0
        %v1527 = vpop.trf.xlu0
        %v1528 = vpop.trf.xlu0
        %v1529 = vpop.trf.xlu0
        %v1530 = vpop.trf.xlu0
        %v1531 = vpop.trf.xlu0
        %v1532 = vpop.trf.xlu0
        %v1533 = vpop.trf.xlu0
        %v1534 = vpop.trf.xlu0
        %v1535 = vpop.trf.xlu0
        %v1536 = vpop.trf.xlu0
        %v1537 = vpop.trf.xlu0
        %v1538 = vpop.trf.xlu0
        %v1539 = vpop.trf.xlu0
        %v1540 = vpop.trf.xlu0
        %s1541 = scalar_lea.vmem %s363, 8 [#allocation3]
        %1542 = vst.msk [vmem:[%s1541] sm:$0xf] %vm782, %v1525
        %s1543 = scalar_lea.vmem %s363, 24 [#allocation3]
        %1544 = vst.msk [vmem:[%s1543 - $0x4] sm:$0xf0] %vm785, %v1525
        %s1545 = scalar_lea.vmem %s363, 40 [#allocation3]
        %1546 = vst.msk [vmem:[%s1545] sm:$0xf] %vm782, %v1526
        %s1547 = scalar_lea.vmem %s363, 56 [#allocation3]
        %1548 = vst.msk [vmem:[%s1547 - $0x4] sm:$0xf0] %vm785, %v1526
        %v1549 = vld [vmem:[%s343 + $0x3] sm:$0x1]
        %v1550 = vld [vmem:[%s343 + $0x7] sm:$0x1]
        %v1551 = vld [vmem:[%s343 + $0xb] sm:$0x1]
        %v1552 = vld [vmem:[%s343 + $0xf] sm:$0x1]
        %v1553 = vld [vmem:[%s343 + $0x13] sm:$0x1]
        %v1554 = vld [vmem:[%s343 + $0x17] sm:$0x1]
        %v1555 = vld [vmem:[%s343 + $0x1b] sm:$0x1]
        %v1556 = vld [vmem:[%s343 + $0x1f] sm:$0x1]
        %v1557 = vld [vmem:[%s343 + $0x23] sm:$0x1]
        %v1558 = vld [vmem:[%s343 + $0x27] sm:$0x1]
        %v1559 = vld [vmem:[%s343 + $0x2b] sm:$0x1]
        %v1560 = vld [vmem:[%s343 + $0x2f] sm:$0x1]
        %v1561 = vld [vmem:[%s343 + $0x33] sm:$0x1]
        %v1562 = vld [vmem:[%s343 + $0x37] sm:$0x1]
        %v1563 = vld [vmem:[%s343 + $0x3b] sm:$0x1]
        %v1564 = vld [vmem:[%s343 + $0x3f] sm:$0x1]
        %v1565 = vld [vmem:[%s343 + $0x43] sm:$0x1]
        %v1566 = vld [vmem:[%s343 + $0x47] sm:$0x1]
        %v1567 = vld [vmem:[%s343 + $0x4b] sm:$0x1]
        %v1568 = vld [vmem:[%s343 + $0x4f] sm:$0x1]
        %v1569 = vld [vmem:[%s343 + $0x53] sm:$0x1]
        %v1570 = vld [vmem:[%s343 + $0x57] sm:$0x1]
        %v1571 = vld [vmem:[%s343 + $0x5b] sm:$0x1]
        %v1572 = vld [vmem:[%s343 + $0x5f] sm:$0x1]
        %v1573 = vld [vmem:[%s343 + $0x63] sm:$0x1]
        %v1574 = vld [vmem:[%s343 + $0x67] sm:$0x1]
        %v1575 = vld [vmem:[%s343 + $0x6b] sm:$0x1]
        %v1576 = vld [vmem:[%s343 + $0x6f] sm:$0x1]
        %v1577 = vld [vmem:[%s343 + $0x73] sm:$0x1]
        %v1578 = vld [vmem:[%s343 + $0x77] sm:$0x1]
        %v1579 = vld [vmem:[%s343 + $0x7b] sm:$0x1]
        %v1580 = vld [vmem:[%s343 + $0x7f] sm:$0x1]
        %v1613 = vrot.slane %v1550, 7
        %v1614 = vsel %vm468, %v1613, %v1549
        %v1615 = vrot.slane %v1551, 6
        %v1616 = vsel %vm471, %v1615, %v1614
        %v1617 = vrot.slane %v1552, 5
        %v1618 = vsel %vm474, %v1617, %v1616
        %v1619 = vrot.slane %v1553, 4
        %v1620 = vsel %vm477, %v1619, %v1618
        %v1621 = vrot.slane %v1554, 3
        %v1622 = vsel %vm480, %v1621, %v1620
        %v1623 = vrot.slane %v1555, 2
        %v1624 = vsel %vm483, %v1623, %v1622
        %v1625 = vrot.slane %v1556, 1
        %v1626 = vsel %vm486, %v1625, %v1624
        %v1627 = vrot.slane %v1558, 7
        %v1628 = vsel %vm468, %v1627, %v1557
        %v1629 = vrot.slane %v1559, 6
        %v1630 = vsel %vm471, %v1629, %v1628
        %v1631 = vrot.slane %v1560, 5
        %v1632 = vsel %vm474, %v1631, %v1630
        %v1633 = vrot.slane %v1561, 4
        %v1634 = vsel %vm477, %v1633, %v1632
        %v1635 = vrot.slane %v1562, 3
        %v1636 = vsel %vm480, %v1635, %v1634
        %v1637 = vrot.slane %v1563, 2
        %v1638 = vsel %vm483, %v1637, %v1636
        %v1639 = vrot.slane %v1564, 1
        %v1640 = vsel %vm486, %v1639, %v1638
        %v1641 = vrot.slane %v1566, 7
        %v1642 = vsel %vm468, %v1641, %v1565
        %v1643 = vrot.slane %v1567, 6
        %v1644 = vsel %vm471, %v1643, %v1642
        %v1645 = vrot.slane %v1568, 5
        %v1646 = vsel %vm474, %v1645, %v1644
        %v1647 = vrot.slane %v1569, 4
        %v1648 = vsel %vm477, %v1647, %v1646
        %v1649 = vrot.slane %v1570, 3
        %v1650 = vsel %vm480, %v1649, %v1648
        %v1651 = vrot.slane %v1571, 2
        %v1652 = vsel %vm483, %v1651, %v1650
        %v1653 = vrot.slane %v1572, 1
        %v1654 = vsel %vm486, %v1653, %v1652
        %v1655 = vrot.slane %v1574, 7
        %v1656 = vsel %vm468, %v1655, %v1573
        %v1657 = vrot.slane %v1575, 6
        %v1658 = vsel %vm471, %v1657, %v1656
        %v1659 = vrot.slane %v1576, 5
        %v1660 = vsel %vm474, %v1659, %v1658
        %v1661 = vrot.slane %v1577, 4
        %v1662 = vsel %vm477, %v1661, %v1660
        %v1663 = vrot.slane %v1578, 3
        %v1664 = vsel %vm480, %v1663, %v1662
        %v1665 = vrot.slane %v1579, 2
        %v1666 = vsel %vm483, %v1665, %v1664
        %v1667 = vrot.slane %v1580, 1
        %v1668 = vsel %vm486, %v1667, %v1666
        %1673 = vxpose.xlu0.b32.start [1/16] %v1626, 128
        %1674 = vxpose.xlu0.b32.cont [2/16] %v1640, 128
        %1675 = vxpose.xlu0.b32.cont [3/16] %v1654, 128
        %1676 = vxpose.xlu0.b32.cont [4/16] %v1668, 128
        %1677 = vxpose.xlu0.b32.cont [5/16] 0.0, 128
        %1678 = vxpose.xlu0.b32.cont [6/16] 0.0, 128
        %1679 = vxpose.xlu0.b32.cont [7/16] 0.0, 128
        %1680 = vxpose.xlu0.b32.cont [8/16] 0.0, 128
        %1681 = vxpose.xlu0.b32.cont [9/16] 0.0, 128
        %1682 = vxpose.xlu0.b32.cont [10/16] 0.0, 128
        %1683 = vxpose.xlu0.b32.cont [11/16] 0.0, 128
        %1684 = vxpose.xlu0.b32.cont [12/16] 0.0, 128
        %1685 = vxpose.xlu0.b32.cont [13/16] 0.0, 128
        %1686 = vxpose.xlu0.b32.cont [14/16] 0.0, 128
        %1687 = vxpose.xlu0.b32.cont [15/16] 0.0, 128
        %1688 = vxpose.xlu0.b32.end [16/16] 0.0, 128
        %v1689 = vpop.trf.xlu0
        %v1690 = vpop.trf.xlu0
        %v1691 = vpop.trf.xlu0
        %v1692 = vpop.trf.xlu0
        %v1693 = vpop.trf.xlu0
        %v1694 = vpop.trf.xlu0
        %v1695 = vpop.trf.xlu0
        %v1696 = vpop.trf.xlu0
        %v1697 = vpop.trf.xlu0
        %v1698 = vpop.trf.xlu0
        %v1699 = vpop.trf.xlu0
        %v1700 = vpop.trf.xlu0
        %v1701 = vpop.trf.xlu0
        %v1702 = vpop.trf.xlu0
        %v1703 = vpop.trf.xlu0
        %v1704 = vpop.trf.xlu0
        %v1706 = vsel %vm566, %v1689, 0
        %1708 = vmatprep.subr.mxu0 %v366
        %1709 = vmatpush1.msra.mxu0 %v365
        %1710 = vmatprep.subr.mxu0 %v370
        %1711 = vmatpush1.msra.mxu0 %v369
        %1712 = vmatprep.subr.mxu0 %v374
        %1713 = vmatpush1.msra.mxu0 %v373
        %1714 = vmatprep.subr.mxu0 %v378
        %1715 = vmatpush1.msra.mxu0 %v377
        %1716 = vmatprep.subr.mxu0 0.0
        %1717 = vmatpush1.msra.mxu0 0.0
        %1718 = vmatprep.subr.mxu0 0.0
        %1719 = vmatpush1.msra.mxu0 0.0
        %1720 = vmatprep.subr.mxu0 0.0
        %1721 = vmatpush1.msra.mxu0 0.0
        %1722 = vmatprep.subr.mxu0 0.0
        %1723 = vmatpush1.msra.mxu0 0.0
        %1724 = vmatprep.subr.mxu0 0.0
        %1725 = vmatpush1.msra.mxu0 0.0
        %1726 = vmatprep.subr.mxu0 0.0
        %1727 = vmatpush1.msra.mxu0 0.0
        %1728 = vmatprep.subr.mxu0 0.0
        %1729 = vmatpush1.msra.mxu0 0.0
        %1730 = vmatprep.subr.mxu0 0.0
        %1731 = vmatpush1.msra.mxu0 0.0
        %1732 = vmatprep.subr.mxu0 0.0
        %1733 = vmatpush1.msra.mxu0 0.0
        %1734 = vmatprep.subr.mxu0 0.0
        %1735 = vmatpush1.msra.mxu0 0.0
        %1736 = vmatprep.subr.mxu0 0.0
        %1737 = vmatpush1.msra.mxu0 0.0
        %1738 = vmatprep.subr.mxu0 0.0
        %1739 = vmatpush1.msra.mxu0 0.0
        %1740 = vmatprep.subr.mxu0 0.0
        %1741 = vmatpush1.msra.mxu0 0.0
        %1742 = vmatprep.subr.mxu0 0.0
        %1743 = vmatpush1.msra.mxu0 0.0
        %1744 = vmatprep.subr.mxu0 0.0
        %1745 = vmatpush1.msra.mxu0 0.0
        %1746 = vmatprep.subr.mxu0 0.0
        %1747 = vmatpush1.msra.mxu0 0.0
        %1748 = vmatprep.subr.mxu0 0.0
        %1749 = vmatpush1.msra.mxu0 0.0
        %1750 = vmatprep.subr.mxu0 0.0
        %1751 = vmatpush1.msra.mxu0 0.0
        %1752 = vmatprep.subr.mxu0 0.0
        %1753 = vmatpush1.msra.mxu0 0.0
        %1754 = vmatprep.subr.mxu0 0.0
        %1755 = vmatpush1.msra.mxu0 0.0
        %1756 = vmatprep.subr.mxu0 0.0
        %1757 = vmatpush1.msra.mxu0 0.0
        %1758 = vmatprep.subr.mxu0 0.0
        %1759 = vmatpush1.msra.mxu0 0.0
        %1760 = vmatprep.subr.mxu0 0.0
        %1761 = vmatpush1.msra.mxu0 0.0
        %1762 = vmatprep.subr.mxu0 0.0
        %1763 = vmatpush1.msra.mxu0 0.0
        %1764 = vmatprep.subr.mxu0 0.0
        %1765 = vmatpush1.msra.mxu0 0.0
        %1766 = vmatprep.subr.mxu0 0.0
        %1767 = vmatpush1.msra.mxu0 0.0
        %1768 = vmatprep.subr.mxu0 0.0
        %1769 = vmatpush1.msra.mxu0 0.0
        %1770 = vmatprep.subr.mxu0 0.0
        %1771 = vmatpush1.msra.mxu0 0.0
        %1772 = vmatprep.mubr.f32.mxu0 0.0
        %1773 = vmatmul.mubr.f32.gmra.mrb[0].mxu0 %v1706
        %v1774 = vpop.f32.mrb[0].mxu0
        %v1775 = vadd.f32 %v418, %v1774
        %v1776 = vpop.f32.mrb[0].mxu0
        %v1777 = vadd.f32 %v422, %v1776
        %1778 = vdwg.mxu0
        %1779 = vmatprep.subr.mxu0 %v368
        %1780 = vmatpush1.msra.mxu0 %v367
        %1781 = vmatprep.subr.mxu0 %v372
        %1782 = vmatpush1.msra.mxu0 %v371
        %1783 = vmatprep.subr.mxu0 %v376
        %1784 = vmatpush1.msra.mxu0 %v375
        %1785 = vmatprep.subr.mxu0 %v380
        %1786 = vmatpush1.msra.mxu0 %v379
        %1787 = vmatprep.subr.mxu0 0.0
        %1788 = vmatpush1.msra.mxu0 0.0
        %1789 = vmatprep.subr.mxu0 0.0
        %1790 = vmatpush1.msra.mxu0 0.0
        %1791 = vmatprep.subr.mxu0 0.0
        %1792 = vmatpush1.msra.mxu0 0.0
        %1793 = vmatprep.subr.mxu0 0.0
        %1794 = vmatpush1.msra.mxu0 0.0
        %1795 = vmatprep.subr.mxu0 0.0
        %1796 = vmatpush1.msra.mxu0 0.0
        %1797 = vmatprep.subr.mxu0 0.0
        %1798 = vmatpush1.msra.mxu0 0.0
        %1799 = vmatprep.subr.mxu0 0.0
        %1800 = vmatpush1.msra.mxu0 0.0
        %1801 = vmatprep.subr.mxu0 0.0
        %1802 = vmatpush1.msra.mxu0 0.0
        %1803 = vmatprep.subr.mxu0 0.0
        %1804 = vmatpush1.msra.mxu0 0.0
        %1805 = vmatprep.subr.mxu0 0.0
        %1806 = vmatpush1.msra.mxu0 0.0
        %1807 = vmatprep.subr.mxu0 0.0
        %1808 = vmatpush1.msra.mxu0 0.0
        %1809 = vmatprep.subr.mxu0 0.0
        %1810 = vmatpush1.msra.mxu0 0.0
        %1811 = vmatprep.subr.mxu0 0.0
        %1812 = vmatpush1.msra.mxu0 0.0
        %1813 = vmatprep.subr.mxu0 0.0
        %1814 = vmatpush1.msra.mxu0 0.0
        %1815 = vmatprep.subr.mxu0 0.0
        %1816 = vmatpush1.msra.mxu0 0.0
        %1817 = vmatprep.subr.mxu0 0.0
        %1818 = vmatpush1.msra.mxu0 0.0
        %1819 = vmatprep.subr.mxu0 0.0
        %1820 = vmatpush1.msra.mxu0 0.0
        %1821 = vmatprep.subr.mxu0 0.0
        %1822 = vmatpush1.msra.mxu0 0.0
        %1823 = vmatprep.subr.mxu0 0.0
        %1824 = vmatpush1.msra.mxu0 0.0
        %1825 = vmatprep.subr.mxu0 0.0
        %1826 = vmatpush1.msra.mxu0 0.0
        %1827 = vmatprep.subr.mxu0 0.0
        %1828 = vmatpush1.msra.mxu0 0.0
        %1829 = vmatprep.subr.mxu0 0.0
        %1830 = vmatpush1.msra.mxu0 0.0
        %1831 = vmatprep.subr.mxu0 0.0
        %1832 = vmatpush1.msra.mxu0 0.0
        %1833 = vmatprep.subr.mxu0 0.0
        %1834 = vmatpush1.msra.mxu0 0.0
        %1835 = vmatprep.subr.mxu0 0.0
        %1836 = vmatpush1.msra.mxu0 0.0
        %1837 = vmatprep.subr.mxu0 0.0
        %1838 = vmatpush1.msra.mxu0 0.0
        %1839 = vmatprep.subr.mxu0 0.0
        %1840 = vmatpush1.msra.mxu0 0.0
        %1841 = vmatprep.subr.mxu0 0.0
        %1842 = vmatpush1.msra.mxu0 0.0
        %1843 = vmatprep.mubr.f32.mxu0 0.0
        %1844 = vmatmul.mubr.f32.gmra.mrb[0].mxu0 %v1706
        %v1845 = vpop.f32.mrb[0].mxu0
        %v1846 = vadd.f32 %v426, %v1845
        %v1847 = vpop.f32.mrb[0].mxu0
        %v1848 = vadd.f32 %v430, %v1847
        %1849 = vdwg.mxu0
        %v1854 = vcombine.low %v1775, %v1777
        %v1855 = vcombine.low %v1846, %v1848
        %v1857 = vunpack.c.l.s4 1983009808
        %v1858 = vunpack.c.0.s8 %v1857
        %v1859 = vlaneseq
        %v1860 = vshrl.u32 %v1859, 7
        %v1861 = vsub.s32 %v1858, %v1860
        %v1862 = vrot.slane %v1854, %v1861
        %v1864 = vunpack.c.l.s4 1983009808
        %v1865 = vunpack.c.0.s8 %v1864
        %v1866 = vlaneseq
        %v1867 = vshrl.u32 %v1866, 7
        %v1868 = vsub.s32 %v1865, %v1867
        %v1869 = vrot.slane %v1855, %v1868
        %v1870 = vcombine.low %v1862, %v1869
        %v1871 = vcombine.high %v1862, %v1869
        %v1875 = vunpack.c.l.s4 1966171168
        %v1876 = vunpack.c.0.s8 %v1875
        %v1877 = vlaneseq
        %v1878 = vshrl.u32 %v1877, 7
        %v1879 = vsub.s32 %v1876, %v1878
        %v1880 = vrot.slane %v1870, %v1879
        %v1882 = vunpack.c.l.s4 1966171168
        %v1883 = vunpack.c.0.s8 %v1882
        %v1884 = vlaneseq
        %v1885 = vshrl.u32 %v1884, 7
        %v1886 = vsub.s32 %v1883, %v1885
        %v1887 = vrot.slane %v1871, %v1886
        %1888 = vxpose.xlu0.b32.start [1/16] %v1880, 128
        %1889 = vxpose.xlu0.b32.cont [2/16] %v1887, 128
        %1890 = vxpose.xlu0.b32.cont [3/16] 0.0, 128
        %1891 = vxpose.xlu0.b32.cont [4/16] 0.0, 128
        %1892 = vxpose.xlu0.b32.cont [5/16] 0.0, 128
        %1893 = vxpose.xlu0.b32.cont [6/16] 0.0, 128
        %1894 = vxpose.xlu0.b32.cont [7/16] 0.0, 128
        %1895 = vxpose.xlu0.b32.cont [8/16] 0.0, 128
        %1896 = vxpose.xlu0.b32.cont [9/16] 0.0, 128
        %1897 = vxpose.xlu0.b32.cont [10/16] 0.0, 128
        %1898 = vxpose.xlu0.b32.cont [11/16] 0.0, 128
        %1899 = vxpose.xlu0.b32.cont [12/16] 0.0, 128
        %1900 = vxpose.xlu0.b32.cont [13/16] 0.0, 128
        %1901 = vxpose.xlu0.b32.cont [14/16] 0.0, 128
        %1902 = vxpose.xlu0.b32.cont [15/16] 0.0, 128
        %1903 = vxpose.xlu0.b32.end [16/16] 0.0, 128
        %v1904 = vpop.trf.xlu0
        %v1905 = vpop.trf.xlu0
        %v1906 = vpop.trf.xlu0
        %v1907 = vpop.trf.xlu0
        %v1908 = vpop.trf.xlu0
        %v1909 = vpop.trf.xlu0
        %v1910 = vpop.trf.xlu0
        %v1911 = vpop.trf.xlu0
        %v1912 = vpop.trf.xlu0
        %v1913 = vpop.trf.xlu0
        %v1914 = vpop.trf.xlu0
        %v1915 = vpop.trf.xlu0
        %v1916 = vpop.trf.xlu0
        %v1917 = vpop.trf.xlu0
        %v1918 = vpop.trf.xlu0
        %v1919 = vpop.trf.xlu0
        %s1920 = scalar_lea.vmem %s363, 12 [#allocation3]
        %1921 = vst.msk [vmem:[%s1920] sm:$0xf] %vm782, %v1904
        %s1922 = scalar_lea.vmem %s363, 28 [#allocation3]
        %1923 = vst.msk [vmem:[%s1922 - $0x4] sm:$0xf0] %vm785, %v1904
        %s1924 = scalar_lea.vmem %s363, 44 [#allocation3]
        %1925 = vst.msk [vmem:[%s1924] sm:$0xf] %vm782, %v1905
        %s1926 = scalar_lea.vmem %s363, 60 [#allocation3]
        %1927 = vst.msk [vmem:[%s1926 - $0x4] sm:$0xf0] %vm785, %v1905
        %s1928 = sand.u32 %s120, 1
        %s1929 = scalar_lea.sflag [#allocation4], %s1928
        %s1930 = sand.u32 %s120, 1
        %s1931 = smul.addr %s1930, 64
        %s1932 = scalar_lea.vmem [#allocation3], %s1931
        // Predicated region
        $region74: #{tpu_custom_call.1} parent=68 // pred_check
          %p1933 = pneg %p130
        $region75: #{tpu_custom_call.1} parent=68 // pred_check_branch
          %1935 = sbr.rel (%p1933) target = $region77
        $region76: #{tpu_custom_call.1} parent=68 // pred_region
          #allocation6 [shape = 'u32[6]{0}', space=smem, size = 0x18, scoped, tag = 'DMA stride descriptor']
          %s1936 = smul.u32 4, %s24
          %s1938 = ssub.s32 1024, 1024
          %1939 = vsyncadd %s1929, %s1938
          %s1940 = smul.addr %s23, 4
          %s1941 = sadd.s32 %s1936, %s1940
          %s1942 = smul.addr %s22, 32
          %s1943 = sadd.s32 %s1941, %s1942
          %s1944 = smul.addr %s1943, 64
          %s1945 = scalar_lea.hbm %s3, %s1944
          %s1947 = sshll.u32 1, 14
          %s1948 = sxor.u32 4294967295, %s1947
          %s1951 = sshll.u32 7, 18
          %s1952 = sxor.u32 4294967295, %s1951
          %s1953 = sand.u32 0, %s1952
          %s1955 = sor.u32 %s1953, 0
          %s1957 = sshll.u32 3, 24
          %s1958 = sxor.u32 4294967295, %s1957
          %s1959 = sand.u32 %s1955, %s1958
          %s1961 = sor.u32 %s1959, 0
          %s1962 = sshll.u32 %s1932, 4
          %s1963 = int_to_ptr.vmem [resolvable:$true] %s1962
          %1969 = sst [smem:[#allocation6]] 256
          %s1970 = scalar_lea.smem [#allocation6], 1
          %1971 = sst [smem:[%s1970]] 512
          %s1972 = scalar_lea.smem [#allocation6], 2
          %1973 = sst [smem:[%s1972]] 4
          %s1974 = scalar_lea.smem [#allocation6], 3
          %1975 = sst [smem:[%s1974]] 64
          %s1976 = scalar_lea.smem [#allocation6], 4
          %1977 = sst [smem:[%s1976]] 64
          %s1978 = scalar_lea.smem [#allocation6], 5
          %1979 = sst [smem:[%s1978]] 4
          %1981 = dma.general %s1963, 1024, %s1945, %s1929, [#allocation5], [#allocation6], %s1961, 0
        $region77: #{tpu_custom_call.1} parent=68 // pred_fallthru
          _
      $region69: #{tpu_custom_call.1} parent=5 // pred_fallthru
        _
      %p1982 = scmp.le.s32.totalorder 2, %s12
      // Predicated region
      $region78: #{tpu_custom_call.1} parent=5 // pred_check
        %p1983 = pneg %p1982
      $region79: #{tpu_custom_call.1} parent=5 // pred_check_branch
        %1985 = sbr.rel (%p1983) target = $region81
      $region80: #{tpu_custom_call.1} parent=5 // pred_region
        %s1986 = ssub.s32 %s12, 2
        // Predicated region
        $region82: #{tpu_custom_call.1} parent=80 // pred_check
          %p1987 = pneg %p136
        $region83: #{tpu_custom_call.1} parent=80 // pred_check_branch
          %1989 = sbr.rel (%p1987) target = $region85
        $region84: #{tpu_custom_call.1} parent=80 // pred_region
          %s1990 = sand.u32 %s121, 1
          %s1991 = scalar_lea.sflag [#allocation4], %s1990
          %s1992 = sand.u32 %s121, 1
          %s1993 = smul.addr %s1992, 64
          %s1994 = scalar_lea.vmem [#allocation3], %s1993
          %1995 = dma.done %s1991, 1024
        $region85: #{tpu_custom_call.1} parent=80 // pred_fallthru
          _
      $region81: #{tpu_custom_call.1} parent=5 // pred_fallthru
        _
    $region6: #{tpu_custom_call.1} parent=1 // loop_footer
      %s16 = sadd.s32 1, %s12
    $region7: #{tpu_custom_call.1} parent=1 // loop_footer_branch
      %11 = sbr.rel target = $region3
    $region8: #{tpu_custom_call.1} parent=1 // loop_exit
      _
    %1996 = vsyncpa [#allocation4], 1
    %s1997 = scalar_lea.sflag [#allocation4], 1
    %1998 = vsyncpa %s1997, 1

</llo_original>
